<compile_context>
chip_gen: v6e
topology: v6e:2x2x1
jax: 0.10.0
libtpu: 0.0.40
codegen_flags: <defaults>
</compile_context>

<pallas_src>
import functools

import jax
import jax.numpy as jnp
from jax import lax
from jax.experimental import pallas as pl
from jax.experimental.pallas import tpu as pltpu


def seblock_kernel(x_ref, col_ref,
                   w1f_ref, cb1_ref, bs1_ref, bt1_ref,
                   w2f_ref, cb2_ref, bs2_ref, bt2_ref,
                   wse1_ref, bse1_ref, wse2t_ref, bse2_ref,
                   out_ref, *, H, W):
    C = out_ref.shape[1]
    HW = H * W

    col = col_ref[...]                                      # (1, HW) int32: column index w
    pos = lax.broadcasted_iota(jnp.int32, (1, HW), 1)       # (1, HW): flat pixel index

    # Zero-padding masks for the shifted taps (image border handling).
    wmask = (col >= 1, None, col <= W - 2)                  # dx = 0, 1, 2
    hmask = (pos >= W, None, pos < (H - 1) * W)             # dy = 0, 1, 2

    def conv3x3(inp, wf_ref):
        # inp: (C, HW) f32.   wf_ref: (3, Cout, 3*Cin) bf16 with wf[dx][o, dy*Cin + ci].
        # Shift = XLU lane roll; wrap-around lanes are exactly the out-of-image taps
        # and are zeroed by the masks, so the circular roll is safe.
        acc = jnp.zeros((C, HW), jnp.float32)
        for dx in range(3):
            base = inp if dx == 1 else pltpu.roll(inp, (-(dx - 1)) % HW, 1)
            if wmask[dx] is not None:
                base = jnp.where(wmask[dx], base, 0.0)
            parts = []
            for dy in range(3):
                part = base if dy == 1 else pltpu.roll(base, (-(dy - 1) * W) % HW, 1)
                if hmask[dy] is not None:
                    part = jnp.where(hmask[dy], part, 0.0)
                parts.append(part)
            patch = jnp.concatenate(parts, axis=0).astype(jnp.bfloat16)   # (3*Cin, HW)
            acc = acc + jnp.dot(wf_ref[dx], patch,
                                preferred_element_type=jnp.float32)       # (Cout, HW)
        return acc

    # --- conv1 (3x3, pad=1, stride=1) + bias + BN1 + ReLU ---
    h1 = conv3x3(x_ref[0], w1f_ref) + cb1_ref[...]
    h1 = jnp.maximum(h1 * bs1_ref[...] + bt1_ref[...], 0.0)

    # --- conv2 (3x3, pad=1, stride=1) + bias + BN2 ---
    s = conv3x3(h1, w2f_ref) + cb2_ref[...]
    s = s * bs2_ref[...] + bt2_ref[...]                      # (C, HW) == x_shortcut

    # --- SE branch on VPU/XLU: GAP -> 1x1 -> ReLU -> 1x1 -> sigmoid ---
    pooled = jnp.mean(s, axis=1, keepdims=True)              # (C, 1)   lane reduce
    z = jnp.maximum(jnp.sum(wse1_ref[...] * pooled, axis=0, keepdims=True)
                    + bse1_ref[...], 0.0)                    # (1, Ch)  sublane reduce
    g = jax.nn.sigmoid(jnp.sum(wse2t_ref[...] * z, axis=1, keepdims=True)
                       + bse2_ref[...])                      # (C, 1)   lane reduce

    # --- channel-wise gating + residual (x re-read from its VMEM block) ---
    y = s * g + x_ref[0]
    out_ref[...] = y[jnp.newaxis].astype(out_ref.dtype)      # dense full-lane store


def seblock_forward(x, params):
    """x: (N, C, H, W) NCHW float32; one batch element per grid step."""
    N, C, H, W = x.shape
    HW = H * W
    (w1, cb1, bs1, bt1, w2, cb2, bs2, bt2, wse1, bse1, wse2, bse2) = params
    Cout = w1.shape[3]
    Ch = wse1.shape[1]
    assert C == w1.shape[2] == Cout, "residual add requires in_channels == out_channels"

    x2 = x.reshape(N, C, HW)                                 # free: same HBM layout
    col = (jnp.arange(HW, dtype=jnp.int32) % W).reshape(1, HW)

    # Fold dy into the contraction: wf[dx][o, dy*Cin + ci] = w[dy, dx, ci, o]  (bf16 MXU).
    def fold(w):
        return jnp.transpose(w, (1, 3, 0, 2)).reshape(3, Cout, 3 * C).astype(jnp.bfloat16)

    def colv(v):                                             # per-channel column (C, 1)
        return v.reshape(-1, 1).astype(jnp.float32)

    operands = (
        x2, col,
        fold(w1), colv(cb1), colv(bs1), colv(bt1),
        fold(w2), colv(cb2), colv(bs2), colv(bt2),
        wse1.astype(jnp.float32),                            # (C, Ch)
        bse1.reshape(1, Ch).astype(jnp.float32),             # (1, Ch)
        wse2.T.astype(jnp.float32),                          # (C, Ch)  (transposed)
        colv(bse2),                                          # (C, 1)
    )

    def full(a):
        ndim = a.ndim
        def imap(b):
            return (0,) * ndim
        return pl.BlockSpec(a.shape, imap)

    in_specs = [pl.BlockSpec((1, C, HW), lambda b: (b, 0, 0))]
    in_specs += [full(a) for a in operands[1:]]

    grid_spec = pltpu.PrefetchScalarGridSpec(
        num_scalar_prefetch=0,
        grid=(N,),          # keep >= 2 grid steps so both v7x TensorCores get work
        in_specs=in_specs,
        out_specs=pl.BlockSpec((1, C, HW), lambda b: (b, 0, 0)),
    )
    y2 = pl.pallas_call(
        functools.partial(seblock_kernel, H=H, W=W),
        out_shape=jax.ShapeDtypeStruct((N, C, HW), x.dtype),
        grid_spec=grid_spec,
        compiler_params=pltpu.CompilerParams(dimension_semantics=("parallel",)),
    )(*operands)
    return y2.reshape(N, C, H, W)


def ref_forward(x, params, *, match_kernel_bf16=True):
    """Pure-JAX NCHW reference.  With match_kernel_bf16 it mimics the kernel's bf16
    MXU inputs (f32 accumulation) so the comparison tolerance stays tight."""
    (w1, cb1, bs1, bt1, w2, cb2, bs2, bt2, wse1, bse1, wse2, bse2) = params
    if match_kernel_bf16:
        r = lambda a: a.astype(jnp.bfloat16).astype(jnp.float32)
    else:
        r = lambda a: a
    dn = ('NCHW', 'HWIO', 'NCHW')
    bc = lambda v: v.reshape(1, -1, 1, 1)

    h = lax.conv_general_dilated(r(x), r(w1), (1, 1), 'SAME', dimension_numbers=dn,
                                 precision=lax.Precision.HIGHEST) + bc(cb1)
    h = jnp.maximum(h * bc(bs1) + bc(bt1), 0.0)
    s = lax.conv_general_dilated(r(h), r(w2), (1, 1), 'SAME', dimension_numbers=dn,
                                 precision=lax.Precision.HIGHEST) + bc(cb2)
    s = s * bc(bs2) + bc(bt2)
    pooled = jnp.mean(s, axis=(2, 3))                        # (N, C)
    z = jnp.maximum(pooled @ wse1 + bse1, 0.0)               # (N, Ch)
    g = jax.nn.sigmoid(z @ wse2 + bse2)                      # (N, C)
    return s * g[:, :, None, None] + x


if __name__ == "__main__":
    N, C, H, W = 2, 32, 16, 16      # in_channels == out_channels (residual add)
    reduce = 4                      # SE hidden channels = C // reduce = 8
    Ch = C // reduce
    eps = 1e-5

    keys = jax.random.split(jax.random.PRNGKey(0), 16)
    x = jax.random.normal(keys[0], (N, C, H, W), jnp.float32)

    # conv1 + BN1 (inference: scale = gamma/sqrt(var+eps), shift = beta - mean*scale)
    w1 = jax.random.normal(keys[1], (3, 3, C, C), jnp.float32) * 0.1
    cb1 = jax.random.normal(keys[2], (C,), jnp.float32) * 0.1
    g1 = jax.random.uniform(keys[3], (C,), minval=0.5, maxval=1.5)
    b1 = jax.random.normal(keys[4], (C,)) * 0.1
    m1 = jax.random.normal(keys[5], (C,)) * 0.1
    v1 = jax.random.uniform(keys[6], (C,), minval=0.5, maxval=1.5)
    bs1 = g1 / jnp.sqrt(v1 + eps)
    bt1 = b1 - m1 * bs1

    # conv2 + BN2
    w2 = jax.random.normal(keys[7], (3, 3, C, C), jnp.float32) * 0.1
    cb2 = jax.random.normal(keys[8], (C,), jnp.float32) * 0.1
    g2 = jax.random.uniform(keys[9], (C,), minval=0.5, maxval=1.5)
    b2 = jax.random.normal(keys[10], (C,)) * 0.1
    m2 = jax.random.normal(keys[11], (C,)) * 0.1
    v2 = jax.random.uniform(keys[12], (C,), minval=0.5, maxval=1.5)
    bs2 = g2 / jnp.sqrt(v2 + eps)
    bt2 = b2 - m2 * bs2

    # SE branch 1x1 convs as matmul weights
    wse1 = jax.random.normal(keys[13], (C, Ch), jnp.float32) * 0.1
    bse1 = jax.random.normal(keys[14], (Ch,), jnp.float32) * 0.1
    wse2 = jax.random.normal(keys[15], (Ch, C), jnp.float32) * 0.1
    bse2 = jnp.zeros((C,), jnp.float32)

    params = (w1, cb1, bs1, bt1, w2, cb2, bs2, bt2, wse1, bse1, wse2, bse2)

    out = seblock_forward(x, params)
    jax.block_until_ready(out)

    ref = ref_forward(x, params)
    assert out.shape == (N, C, H, W)
    err = float(jnp.max(jnp.abs(out - ref)))
    assert jnp.allclose(out, ref, atol=1e-2, rtol=1e-2), err
    print("KERNEL_OK")
</pallas_src>

<mosaic_0001>
module attributes {stable_mosaic.version = 11 : i64} {
  func.func @seblock_kernel(%arg0: i32, %arg1: memref<1x32x256xf32, #tpu.memory_space<vmem>>, %arg2: memref<1x256xi32, #tpu.memory_space<vmem>>, %arg3: memref<3x32x96xbf16, #tpu.memory_space<vmem>>, %arg4: memref<32x1xf32, #tpu.memory_space<vmem>>, %arg5: memref<32x1xf32, #tpu.memory_space<vmem>>, %arg6: memref<32x1xf32, #tpu.memory_space<vmem>>, %arg7: memref<3x32x96xbf16, #tpu.memory_space<vmem>>, %arg8: memref<32x1xf32, #tpu.memory_space<vmem>>, %arg9: memref<32x1xf32, #tpu.memory_space<vmem>>, %arg10: memref<32x1xf32, #tpu.memory_space<vmem>>, %arg11: memref<32x8xf32, #tpu.memory_space<vmem>>, %arg12: memref<1x8xf32, #tpu.memory_space<vmem>>, %arg13: memref<32x8xf32, #tpu.memory_space<vmem>>, %arg14: memref<32x1xf32, #tpu.memory_space<vmem>>, %arg15: memref<1x32x256xf32, #tpu.memory_space<vmem>>) attributes {dimension_semantics = [#tpu.dimension_semantics<parallel>], iteration_bounds = array<i64: 2>, scalar_prefetch = 0 : i64, scratch_operands = 0 : i64, tpu.core_type = #tpu.core_type<tc>, window_params = [{transform_indices = @transform_0, window_bounds = array<i64: 1, 32, 256>}, {pipeline_mode = #tpu.pipeline_mode<synchronous>, transform_indices = @transform_1, window_bounds = array<i64: 1, 256>}, {pipeline_mode = #tpu.pipeline_mode<synchronous>, transform_indices = @transform_2, window_bounds = array<i64: 3, 32, 96>}, {pipeline_mode = #tpu.pipeline_mode<synchronous>, transform_indices = @transform_3, window_bounds = array<i64: 32, 1>}, {pipeline_mode = #tpu.pipeline_mode<synchronous>, transform_indices = @transform_4, window_bounds = array<i64: 32, 1>}, {pipeline_mode = #tpu.pipeline_mode<synchronous>, transform_indices = @transform_5, window_bounds = array<i64: 32, 1>}, {pipeline_mode = #tpu.pipeline_mode<synchronous>, transform_indices = @transform_6, window_bounds = array<i64: 3, 32, 96>}, {pipeline_mode = #tpu.pipeline_mode<synchronous>, transform_indices = @transform_7, window_bounds = array<i64: 32, 1>}, {pipeline_mode = #tpu.pipeline_mode<synchronous>, transform_indices = @transform_8, window_bounds = array<i64: 32, 1>}, {pipeline_mode = #tpu.pipeline_mode<synchronous>, transform_indices = @transform_9, window_bounds = array<i64: 32, 1>}, {pipeline_mode = #tpu.pipeline_mode<synchronous>, transform_indices = @transform_10, window_bounds = array<i64: 32, 8>}, {pipeline_mode = #tpu.pipeline_mode<synchronous>, transform_indices = @transform_11, window_bounds = array<i64: 1, 8>}, {pipeline_mode = #tpu.pipeline_mode<synchronous>, transform_indices = @transform_12, window_bounds = array<i64: 32, 8>}, {pipeline_mode = #tpu.pipeline_mode<synchronous>, transform_indices = @transform_13, window_bounds = array<i64: 32, 1>}, {transform_indices = @transform_14, window_bounds = array<i64: 1, 32, 256>}]} {
    %c0 = arith.constant 0 : index
    %c0_0 = arith.constant 0 : index
    %0 = vector.load %arg2[%c0, %c0_0] : memref<1x256xi32, #tpu.memory_space<vmem>>, vector<1x256xi32>
    %1 = tpu.iota {dimensions = array<i32: 1>} : vector<1x256xi32>
    %c1_i32 = arith.constant 1 : i32
    %2 = vector.broadcast %c1_i32 : i32 to vector<1x256xi32>
    %3 = arith.cmpi sge, %0, %2 : vector<1x256xi32>
    %c14_i32 = arith.constant 14 : i32
    %4 = vector.broadcast %c14_i32 : i32 to vector<1x256xi32>
    %5 = arith.cmpi sle, %0, %4 : vector<1x256xi32>
    %c16_i32 = arith.constant 16 : i32
    %6 = vector.broadcast %c16_i32 : i32 to vector<1x256xi32>
    %7 = arith.cmpi sge, %1, %6 : vector<1x256xi32>
    %c240_i32 = arith.constant 240 : i32
    %8 = vector.broadcast %c240_i32 : i32 to vector<1x256xi32>
    %9 = arith.cmpi slt, %1, %8 : vector<1x256xi32>
    %c0_1 = arith.constant 0 : index
    %c0_2 = arith.constant 0 : index
    %c0_3 = arith.constant 0 : index
    %10 = vector.load %arg1[%c0_1, %c0_2, %c0_3] : memref<1x32x256xf32, #tpu.memory_space<vmem>>, vector<1x32x256xf32>
    %11 = vector.shape_cast %10 : vector<1x32x256xf32> to vector<32x256xf32>
    %cst = arith.constant 0.000000e+00 : f32
    %12 = vector.broadcast %cst : f32 to vector<32x256xf32>
    %c1_i32_4 = arith.constant 1 : i32
    %13 = tpu.dynamic_rotate %11 by %c1_i32_4 dim 1 : vector<32x256xf32>, i32 -> vector<32x256xf32>
    %cst_5 = arith.constant 0.000000e+00 : f32
    %14 = vector.shape_cast %3 : vector<1x256xi1> to vector<1x256xi1>
    %15 = vector.broadcast %14 : vector<1x256xi1> to vector<32x256xi1>
    %16 = vector.broadcast %cst_5 : f32 to vector<32x256xf32>
    %17 = arith.select %15, %13, %16 : vector<32x256xi1>, vector<32x256xf32>
    %c16_i32_6 = arith.constant 16 : i32
    %18 = tpu.dynamic_rotate %17 by %c16_i32_6 dim 1 : vector<32x256xf32>, i32 -> vector<32x256xf32>
    %cst_7 = arith.constant 0.000000e+00 : f32
    %19 = vector.shape_cast %7 : vector<1x256xi1> to vector<1x256xi1>
    %20 = vector.broadcast %19 : vector<1x256xi1> to vector<32x256xi1>
    %21 = vector.broadcast %cst_7 : f32 to vector<32x256xf32>
    %22 = arith.select %20, %18, %21 : vector<32x256xi1>, vector<32x256xf32>
    %c240_i32_8 = arith.constant 240 : i32
    %23 = tpu.dynamic_rotate %17 by %c240_i32_8 dim 1 : vector<32x256xf32>, i32 -> vector<32x256xf32>
    %cst_9 = arith.constant 0.000000e+00 : f32
    %24 = vector.shape_cast %9 : vector<1x256xi1> to vector<1x256xi1>
    %25 = vector.broadcast %24 : vector<1x256xi1> to vector<32x256xi1>
    %26 = vector.broadcast %cst_9 : f32 to vector<32x256xf32>
    %27 = arith.select %25, %23, %26 : vector<32x256xi1>, vector<32x256xf32>
    %28 = tpu.concatenate %22, %17, %27 in 0 : vector<32x256xf32>, vector<32x256xf32>, vector<32x256xf32> -> vector<96x256xf32>
    %29 = arith.truncf %28 : vector<96x256xf32> to vector<96x256xbf16>
    %c0_10 = arith.constant 0 : index
    %c0_11 = arith.constant 0 : index
    %c0_12 = arith.constant 0 : index
    %30 = vector.load %arg3[%c0_10, %c0_11, %c0_12] : memref<3x32x96xbf16, #tpu.memory_space<vmem>>, vector<1x32x96xbf16>
    %31 = vector.shape_cast %30 : vector<1x32x96xbf16> to vector<32x96xbf16>
    %cst_13 = arith.constant dense<0.000000e+00> : vector<32x256xf32>
    %32 = tpu.matmul %31, %29, %cst_13 {dimension_numbers = #tpu.dot_dimension_numbers<[1], [0], [0], [1], [0, 0, 1, 1], [], []>} : vector<32x96xbf16>, vector<96x256xbf16>, vector<32x256xf32> -> vector<32x256xf32>
    %33 = arith.addf %12, %32 : vector<32x256xf32>
    %c16_i32_14 = arith.constant 16 : i32
    %34 = tpu.dynamic_rotate %11 by %c16_i32_14 dim 1 : vector<32x256xf32>, i32 -> vector<32x256xf32>
    %cst_15 = arith.constant 0.000000e+00 : f32
    %35 = vector.shape_cast %7 : vector<1x256xi1> to vector<1x256xi1>
    %36 = vector.broadcast %35 : vector<1x256xi1> to vector<32x256xi1>
    %37 = vector.broadcast %cst_15 : f32 to vector<32x256xf32>
    %38 = arith.select %36, %34, %37 : vector<32x256xi1>, vector<32x256xf32>
    %c240_i32_16 = arith.constant 240 : i32
    %39 = tpu.dynamic_rotate %11 by %c240_i32_16 dim 1 : vector<32x256xf32>, i32 -> vector<32x256xf32>
    %cst_17 = arith.constant 0.000000e+00 : f32
    %40 = vector.shape_cast %9 : vector<1x256xi1> to vector<1x256xi1>
    %41 = vector.broadcast %40 : vector<1x256xi1> to vector<32x256xi1>
    %42 = vector.broadcast %cst_17 : f32 to vector<32x256xf32>
    %43 = arith.select %41, %39, %42 : vector<32x256xi1>, vector<32x256xf32>
    %44 = tpu.concatenate %38, %11, %43 in 0 : vector<32x256xf32>, vector<32x256xf32>, vector<32x256xf32> -> vector<96x256xf32>
    %45 = arith.truncf %44 : vector<96x256xf32> to vector<96x256xbf16>
    %c1 = arith.constant 1 : index
    %c0_18 = arith.constant 0 : index
    %c0_19 = arith.constant 0 : index
    %46 = vector.load %arg3[%c1, %c0_18, %c0_19] : memref<3x32x96xbf16, #tpu.memory_space<vmem>>, vector<1x32x96xbf16>
    %47 = vector.shape_cast %46 : vector<1x32x96xbf16> to vector<32x96xbf16>
    %cst_20 = arith.constant dense<0.000000e+00> : vector<32x256xf32>
    %48 = tpu.matmul %47, %45, %cst_20 {dimension_numbers = #tpu.dot_dimension_numbers<[1], [0], [0], [1], [0, 0, 1, 1], [], []>} : vector<32x96xbf16>, vector<96x256xbf16>, vector<32x256xf32> -> vector<32x256xf32>
    %49 = arith.addf %33, %48 : vector<32x256xf32>
    %c255_i32 = arith.constant 255 : i32
    %50 = tpu.dynamic_rotate %11 by %c255_i32 dim 1 : vector<32x256xf32>, i32 -> vector<32x256xf32>
    %cst_21 = arith.constant 0.000000e+00 : f32
    %51 = vector.shape_cast %5 : vector<1x256xi1> to vector<1x256xi1>
    %52 = vector.broadcast %51 : vector<1x256xi1> to vector<32x256xi1>
    %53 = vector.broadcast %cst_21 : f32 to vector<32x256xf32>
    %54 = arith.select %52, %50, %53 : vector<32x256xi1>, vector<32x256xf32>
    %c16_i32_22 = arith.constant 16 : i32
    %55 = tpu.dynamic_rotate %54 by %c16_i32_22 dim 1 : vector<32x256xf32>, i32 -> vector<32x256xf32>
    %cst_23 = arith.constant 0.000000e+00 : f32
    %56 = vector.shape_cast %7 : vector<1x256xi1> to vector<1x256xi1>
    %57 = vector.broadcast %56 : vector<1x256xi1> to vector<32x256xi1>
    %58 = vector.broadcast %cst_23 : f32 to vector<32x256xf32>
    %59 = arith.select %57, %55, %58 : vector<32x256xi1>, vector<32x256xf32>
    %c240_i32_24 = arith.constant 240 : i32
    %60 = tpu.dynamic_rotate %54 by %c240_i32_24 dim 1 : vector<32x256xf32>, i32 -> vector<32x256xf32>
    %cst_25 = arith.constant 0.000000e+00 : f32
    %61 = vector.shape_cast %9 : vector<1x256xi1> to vector<1x256xi1>
    %62 = vector.broadcast %61 : vector<1x256xi1> to vector<32x256xi1>
    %63 = vector.broadcast %cst_25 : f32 to vector<32x256xf32>
    %64 = arith.select %62, %60, %63 : vector<32x256xi1>, vector<32x256xf32>
    %65 = tpu.concatenate %59, %54, %64 in 0 : vector<32x256xf32>, vector<32x256xf32>, vector<32x256xf32> -> vector<96x256xf32>
    %66 = arith.truncf %65 : vector<96x256xf32> to vector<96x256xbf16>
    %c2 = arith.constant 2 : index
    %c0_26 = arith.constant 0 : index
    %c0_27 = arith.constant 0 : index
    %67 = vector.load %arg3[%c2, %c0_26, %c0_27] : memref<3x32x96xbf16, #tpu.memory_space<vmem>>, vector<1x32x96xbf16>
    %68 = vector.shape_cast %67 : vector<1x32x96xbf16> to vector<32x96xbf16>
    %cst_28 = arith.constant dense<0.000000e+00> : vector<32x256xf32>
    %69 = tpu.matmul %68, %66, %cst_28 {dimension_numbers = #tpu.dot_dimension_numbers<[1], [0], [0], [1], [0, 0, 1, 1], [], []>} : vector<32x96xbf16>, vector<96x256xbf16>, vector<32x256xf32> -> vector<32x256xf32>
    %70 = arith.addf %49, %69 : vector<32x256xf32>
    %c0_29 = arith.constant 0 : index
    %c0_30 = arith.constant 0 : index
    %71 = vector.load %arg4[%c0_29, %c0_30] : memref<32x1xf32, #tpu.memory_space<vmem>>, vector<32x1xf32>
    %72 = vector.broadcast %71 : vector<32x1xf32> to vector<32x256xf32>
    %73 = arith.addf %70, %72 : vector<32x256xf32>
    %c0_31 = arith.constant 0 : index
    %c0_32 = arith.constant 0 : index
    %74 = vector.load %arg5[%c0_31, %c0_32] : memref<32x1xf32, #tpu.memory_space<vmem>>, vector<32x1xf32>
    %75 = vector.broadcast %74 : vector<32x1xf32> to vector<32x256xf32>
    %76 = arith.mulf %73, %75 : vector<32x256xf32>
    %c0_33 = arith.constant 0 : index
    %c0_34 = arith.constant 0 : index
    %77 = vector.load %arg6[%c0_33, %c0_34] : memref<32x1xf32, #tpu.memory_space<vmem>>, vector<32x1xf32>
    %78 = vector.broadcast %77 : vector<32x1xf32> to vector<32x256xf32>
    %79 = arith.addf %76, %78 : vector<32x256xf32>
    %cst_35 = arith.constant 0.000000e+00 : f32
    %80 = vector.broadcast %cst_35 : f32 to vector<32x256xf32>
    %81 = arith.maximumf %79, %80 : vector<32x256xf32>
    %cst_36 = arith.constant 0.000000e+00 : f32
    %82 = vector.broadcast %cst_36 : f32 to vector<32x256xf32>
    %c1_i32_37 = arith.constant 1 : i32
    %83 = tpu.dynamic_rotate %81 by %c1_i32_37 dim 1 : vector<32x256xf32>, i32 -> vector<32x256xf32>
    %cst_38 = arith.constant 0.000000e+00 : f32
    %84 = vector.shape_cast %3 : vector<1x256xi1> to vector<1x256xi1>
    %85 = vector.broadcast %84 : vector<1x256xi1> to vector<32x256xi1>
    %86 = vector.broadcast %cst_38 : f32 to vector<32x256xf32>
    %87 = arith.select %85, %83, %86 : vector<32x256xi1>, vector<32x256xf32>
    %c16_i32_39 = arith.constant 16 : i32
    %88 = tpu.dynamic_rotate %87 by %c16_i32_39 dim 1 : vector<32x256xf32>, i32 -> vector<32x256xf32>
    %cst_40 = arith.constant 0.000000e+00 : f32
    %89 = vector.shape_cast %7 : vector<1x256xi1> to vector<1x256xi1>
    %90 = vector.broadcast %89 : vector<1x256xi1> to vector<32x256xi1>
    %91 = vector.broadcast %cst_40 : f32 to vector<32x256xf32>
    %92 = arith.select %90, %88, %91 : vector<32x256xi1>, vector<32x256xf32>
    %c240_i32_41 = arith.constant 240 : i32
    %93 = tpu.dynamic_rotate %87 by %c240_i32_41 dim 1 : vector<32x256xf32>, i32 -> vector<32x256xf32>
    %cst_42 = arith.constant 0.000000e+00 : f32
    %94 = vector.shape_cast %9 : vector<1x256xi1> to vector<1x256xi1>
    %95 = vector.broadcast %94 : vector<1x256xi1> to vector<32x256xi1>
    %96 = vector.broadcast %cst_42 : f32 to vector<32x256xf32>
    %97 = arith.select %95, %93, %96 : vector<32x256xi1>, vector<32x256xf32>
    %98 = tpu.concatenate %92, %87, %97 in 0 : vector<32x256xf32>, vector<32x256xf32>, vector<32x256xf32> -> vector<96x256xf32>
    %99 = arith.truncf %98 : vector<96x256xf32> to vector<96x256xbf16>
    %c0_43 = arith.constant 0 : index
    %c0_44 = arith.constant 0 : index
    %c0_45 = arith.constant 0 : index
    %100 = vector.load %arg7[%c0_43, %c0_44, %c0_45] : memref<3x32x96xbf16, #tpu.memory_space<vmem>>, vector<1x32x96xbf16>
    %101 = vector.shape_cast %100 : vector<1x32x96xbf16> to vector<32x96xbf16>
    %cst_46 = arith.constant dense<0.000000e+00> : vector<32x256xf32>
    %102 = tpu.matmul %101, %99, %cst_46 {dimension_numbers = #tpu.dot_dimension_numbers<[1], [0], [0], [1], [0, 0, 1, 1], [], []>} : vector<32x96xbf16>, vector<96x256xbf16>, vector<32x256xf32> -> vector<32x256xf32>
    %103 = arith.addf %82, %102 : vector<32x256xf32>
    %c16_i32_47 = arith.constant 16 : i32
    %104 = tpu.dynamic_rotate %81 by %c16_i32_47 dim 1 : vector<32x256xf32>, i32 -> vector<32x256xf32>
    %cst_48 = arith.constant 0.000000e+00 : f32
    %105 = vector.shape_cast %7 : vector<1x256xi1> to vector<1x256xi1>
    %106 = vector.broadcast %105 : vector<1x256xi1> to vector<32x256xi1>
    %107 = vector.broadcast %cst_48 : f32 to vector<32x256xf32>
    %108 = arith.select %106, %104, %107 : vector<32x256xi1>, vector<32x256xf32>
    %c240_i32_49 = arith.constant 240 : i32
    %109 = tpu.dynamic_rotate %81 by %c240_i32_49 dim 1 : vector<32x256xf32>, i32 -> vector<32x256xf32>
    %cst_50 = arith.constant 0.000000e+00 : f32
    %110 = vector.shape_cast %9 : vector<1x256xi1> to vector<1x256xi1>
    %111 = vector.broadcast %110 : vector<1x256xi1> to vector<32x256xi1>
    %112 = vector.broadcast %cst_50 : f32 to vector<32x256xf32>
    %113 = arith.select %111, %109, %112 : vector<32x256xi1>, vector<32x256xf32>
    %114 = tpu.concatenate %108, %81, %113 in 0 : vector<32x256xf32>, vector<32x256xf32>, vector<32x256xf32> -> vector<96x256xf32>
    %115 = arith.truncf %114 : vector<96x256xf32> to vector<96x256xbf16>
    %c1_51 = arith.constant 1 : index
    %c0_52 = arith.constant 0 : index
    %c0_53 = arith.constant 0 : index
    %116 = vector.load %arg7[%c1_51, %c0_52, %c0_53] : memref<3x32x96xbf16, #tpu.memory_space<vmem>>, vector<1x32x96xbf16>
    %117 = vector.shape_cast %116 : vector<1x32x96xbf16> to vector<32x96xbf16>
    %cst_54 = arith.constant dense<0.000000e+00> : vector<32x256xf32>
    %118 = tpu.matmul %117, %115, %cst_54 {dimension_numbers = #tpu.dot_dimension_numbers<[1], [0], [0], [1], [0, 0, 1, 1], [], []>} : vector<32x96xbf16>, vector<96x256xbf16>, vector<32x256xf32> -> vector<32x256xf32>
    %119 = arith.addf %103, %118 : vector<32x256xf32>
    %c255_i32_55 = arith.constant 255 : i32
    %120 = tpu.dynamic_rotate %81 by %c255_i32_55 dim 1 : vector<32x256xf32>, i32 -> vector<32x256xf32>
    %cst_56 = arith.constant 0.000000e+00 : f32
    %121 = vector.shape_cast %5 : vector<1x256xi1> to vector<1x256xi1>
    %122 = vector.broadcast %121 : vector<1x256xi1> to vector<32x256xi1>
    %123 = vector.broadcast %cst_56 : f32 to vector<32x256xf32>
    %124 = arith.select %122, %120, %123 : vector<32x256xi1>, vector<32x256xf32>
    %c16_i32_57 = arith.constant 16 : i32
    %125 = tpu.dynamic_rotate %124 by %c16_i32_57 dim 1 : vector<32x256xf32>, i32 -> vector<32x256xf32>
    %cst_58 = arith.constant 0.000000e+00 : f32
    %126 = vector.shape_cast %7 : vector<1x256xi1> to vector<1x256xi1>
    %127 = vector.broadcast %126 : vector<1x256xi1> to vector<32x256xi1>
    %128 = vector.broadcast %cst_58 : f32 to vector<32x256xf32>
    %129 = arith.select %127, %125, %128 : vector<32x256xi1>, vector<32x256xf32>
    %c240_i32_59 = arith.constant 240 : i32
    %130 = tpu.dynamic_rotate %124 by %c240_i32_59 dim 1 : vector<32x256xf32>, i32 -> vector<32x256xf32>
    %cst_60 = arith.constant 0.000000e+00 : f32
    %131 = vector.shape_cast %9 : vector<1x256xi1> to vector<1x256xi1>
    %132 = vector.broadcast %131 : vector<1x256xi1> to vector<32x256xi1>
    %133 = vector.broadcast %cst_60 : f32 to vector<32x256xf32>
    %134 = arith.select %132, %130, %133 : vector<32x256xi1>, vector<32x256xf32>
    %135 = tpu.concatenate %129, %124, %134 in 0 : vector<32x256xf32>, vector<32x256xf32>, vector<32x256xf32> -> vector<96x256xf32>
    %136 = arith.truncf %135 : vector<96x256xf32> to vector<96x256xbf16>
    %c2_61 = arith.constant 2 : index
    %c0_62 = arith.constant 0 : index
    %c0_63 = arith.constant 0 : index
    %137 = vector.load %arg7[%c2_61, %c0_62, %c0_63] : memref<3x32x96xbf16, #tpu.memory_space<vmem>>, vector<1x32x96xbf16>
    %138 = vector.shape_cast %137 : vector<1x32x96xbf16> to vector<32x96xbf16>
    %cst_64 = arith.constant dense<0.000000e+00> : vector<32x256xf32>
    %139 = tpu.matmul %138, %136, %cst_64 {dimension_numbers = #tpu.dot_dimension_numbers<[1], [0], [0], [1], [0, 0, 1, 1], [], []>} : vector<32x96xbf16>, vector<96x256xbf16>, vector<32x256xf32> -> vector<32x256xf32>
    %140 = arith.addf %119, %139 : vector<32x256xf32>
    %c0_65 = arith.constant 0 : index
    %c0_66 = arith.constant 0 : index
    %141 = vector.load %arg8[%c0_65, %c0_66] : memref<32x1xf32, #tpu.memory_space<vmem>>, vector<32x1xf32>
    %142 = vector.broadcast %141 : vector<32x1xf32> to vector<32x256xf32>
    %143 = arith.addf %140, %142 : vector<32x256xf32>
    %c0_67 = arith.constant 0 : index
    %c0_68 = arith.constant 0 : index
    %144 = vector.load %arg9[%c0_67, %c0_68] : memref<32x1xf32, #tpu.memory_space<vmem>>, vector<32x1xf32>
    %145 = vector.broadcast %144 : vector<32x1xf32> to vector<32x256xf32>
    %146 = arith.mulf %143, %145 : vector<32x256xf32>
    %c0_69 = arith.constant 0 : index
    %c0_70 = arith.constant 0 : index
    %147 = vector.load %arg10[%c0_69, %c0_70] : memref<32x1xf32, #tpu.memory_space<vmem>>, vector<32x1xf32>
    %148 = vector.broadcast %147 : vector<32x1xf32> to vector<32x256xf32>
    %149 = arith.addf %146, %148 : vector<32x256xf32>
    %cst_71 = arith.constant dense<0.000000e+00> : vector<32xf32>
    %150 = vector.multi_reduction <add>, %149, %cst_71 [1] : vector<32x256xf32> to vector<32xf32>
    %151 = vector.shape_cast %150 : vector<32xf32> to vector<32x1xf32>
    %cst_72 = arith.constant 2.560000e+02 : f32
    %152 = vector.broadcast %cst_72 : f32 to vector<32x1xf32>
    %153 = arith.divf %151, %152 : vector<32x1xf32>
    %c0_73 = arith.constant 0 : index
    %c0_74 = arith.constant 0 : index
    %154 = vector.load %arg11[%c0_73, %c0_74] : memref<32x8xf32, #tpu.memory_space<vmem>>, vector<32x8xf32>
    %155 = vector.broadcast %153 : vector<32x1xf32> to vector<32x8xf32>
    %156 = arith.mulf %154, %155 : vector<32x8xf32>
    %cst_75 = arith.constant dense<0.000000e+00> : vector<8xf32>
    %157 = vector.multi_reduction <add>, %156, %cst_75 [0] : vector<32x8xf32> to vector<8xf32>
    %158 = vector.shape_cast %157 : vector<8xf32> to vector<1x8xf32>
    %c0_76 = arith.constant 0 : index
    %c0_77 = arith.constant 0 : index
    %159 = vector.load %arg12[%c0_76, %c0_77] : memref<1x8xf32, #tpu.memory_space<vmem>>, vector<1x8xf32>
    %160 = arith.addf %158, %159 : vector<1x8xf32>
    %cst_78 = arith.constant 0.000000e+00 : f32
    %161 = vector.broadcast %cst_78 : f32 to vector<1x8xf32>
    %162 = arith.maximumf %160, %161 : vector<1x8xf32>
    %c0_79 = arith.constant 0 : index
    %c0_80 = arith.constant 0 : index
    %163 = vector.load %arg13[%c0_79, %c0_80] : memref<32x8xf32, #tpu.memory_space<vmem>>, vector<32x8xf32>
    %164 = vector.broadcast %162 : vector<1x8xf32> to vector<32x8xf32>
    %165 = arith.mulf %163, %164 : vector<32x8xf32>
    %cst_81 = arith.constant dense<0.000000e+00> : vector<32xf32>
    %166 = vector.multi_reduction <add>, %165, %cst_81 [1] : vector<32x8xf32> to vector<32xf32>
    %167 = vector.shape_cast %166 : vector<32xf32> to vector<32x1xf32>
    %c0_82 = arith.constant 0 : index
    %c0_83 = arith.constant 0 : index
    %168 = vector.load %arg14[%c0_82, %c0_83] : memref<32x1xf32, #tpu.memory_space<vmem>>, vector<32x1xf32>
    %169 = arith.addf %167, %168 : vector<32x1xf32>
    %170 = arith.negf %169 : vector<32x1xf32>
    %171 = math.exp %170 : vector<32x1xf32>
    %cst_84 = arith.constant 1.000000e+00 : f32
    %172 = vector.broadcast %cst_84 : f32 to vector<32x1xf32>
    %173 = arith.addf %172, %171 : vector<32x1xf32>
    %174 = arith.divf %172, %173 : vector<32x1xf32>
    %175 = vector.broadcast %174 : vector<32x1xf32> to vector<32x256xf32>
    %176 = arith.mulf %149, %175 : vector<32x256xf32>
    %c0_85 = arith.constant 0 : index
    %c0_86 = arith.constant 0 : index
    %c0_87 = arith.constant 0 : index
    %177 = vector.load %arg1[%c0_85, %c0_86, %c0_87] : memref<1x32x256xf32, #tpu.memory_space<vmem>>, vector<1x32x256xf32>
    %178 = vector.shape_cast %177 : vector<1x32x256xf32> to vector<32x256xf32>
    %179 = arith.addf %176, %178 : vector<32x256xf32>
    %180 = vector.shape_cast %179 : vector<32x256xf32> to vector<1x32x256xf32>
    %c0_88 = arith.constant 0 : index
    %c0_89 = arith.constant 0 : index
    %c0_90 = arith.constant 0 : index
    %181 = vector.load %arg15[%c0_88, %c0_89, %c0_90] : memref<1x32x256xf32, #tpu.memory_space<vmem>>, vector<1x32x256xf32>
    tpu.vector_store %arg15[%c0_88, %c0_89, %c0_90], %180 {strides = array<i32>} : memref<1x32x256xf32, #tpu.memory_space<vmem>>, vector<1x32x256xf32>,
    return
  }
  func.func @transform_0(%arg0: i32) -> (i32, i32, i32) {
    %c0_i32 = arith.constant 0 : i32
    %c0_i32_0 = arith.constant 0 : i32
    %c0_i32_1 = arith.constant 0 : i32
    return %arg0, %c0_i32, %c0_i32_0 : i32, i32, i32
  }
  func.func @transform_1(%arg0: i32) -> (i32, i32) {
    %c0_i32 = arith.constant 0 : i32
    %c0_i32_0 = arith.constant 0 : i32
    %c0_i32_1 = arith.constant 0 : i32
    return %c0_i32, %c0_i32_0 : i32, i32
  }
  func.func @transform_2(%arg0: i32) -> (i32, i32, i32) {
    %c0_i32 = arith.constant 0 : i32
    %c0_i32_0 = arith.constant 0 : i32
    %c0_i32_1 = arith.constant 0 : i32
    %c0_i32_2 = arith.constant 0 : i32
    return %c0_i32, %c0_i32_0, %c0_i32_1 : i32, i32, i32
  }
  func.func @transform_3(%arg0: i32) -> (i32, i32) {
    %c0_i32 = arith.constant 0 : i32
    %c0_i32_0 = arith.constant 0 : i32
    %c0_i32_1 = arith.constant 0 : i32
    return %c0_i32, %c0_i32_0 : i32, i32
  }
  func.func @transform_4(%arg0: i32) -> (i32, i32) {
    %c0_i32 = arith.constant 0 : i32
    %c0_i32_0 = arith.constant 0 : i32
    %c0_i32_1 = arith.constant 0 : i32
    return %c0_i32, %c0_i32_0 : i32, i32
  }
  func.func @transform_5(%arg0: i32) -> (i32, i32) {
    %c0_i32 = arith.constant 0 : i32
    %c0_i32_0 = arith.constant 0 : i32
    %c0_i32_1 = arith.constant 0 : i32
    return %c0_i32, %c0_i32_0 : i32, i32
  }
  func.func @transform_6(%arg0: i32) -> (i32, i32, i32) {
    %c0_i32 = arith.constant 0 : i32
    %c0_i32_0 = arith.constant 0 : i32
    %c0_i32_1 = arith.constant 0 : i32
    %c0_i32_2 = arith.constant 0 : i32
    return %c0_i32, %c0_i32_0, %c0_i32_1 : i32, i32, i32
  }
  func.func @transform_7(%arg0: i32) -> (i32, i32) {
    %c0_i32 = arith.constant 0 : i32
    %c0_i32_0 = arith.constant 0 : i32
    %c0_i32_1 = arith.constant 0 : i32
    return %c0_i32, %c0_i32_0 : i32, i32
  }
  func.func @transform_8(%arg0: i32) -> (i32, i32) {
    %c0_i32 = arith.constant 0 : i32
    %c0_i32_0 = arith.constant 0 : i32
    %c0_i32_1 = arith.constant 0 : i32
    return %c0_i32, %c0_i32_0 : i32, i32
  }
  func.func @transform_9(%arg0: i32) -> (i32, i32) {
    %c0_i32 = arith.constant 0 : i32
    %c0_i32_0 = arith.constant 0 : i32
    %c0_i32_1 = arith.constant 0 : i32
    return %c0_i32, %c0_i32_0 : i32, i32
  }
  func.func @transform_10(%arg0: i32) -> (i32, i32) {
    %c0_i32 = arith.constant 0 : i32
    %c0_i32_0 = arith.constant 0 : i32
    %c0_i32_1 = arith.constant 0 : i32
    return %c0_i32, %c0_i32_0 : i32, i32
  }
  func.func @transform_11(%arg0: i32) -> (i32, i32) {
    %c0_i32 = arith.constant 0 : i32
    %c0_i32_0 = arith.constant 0 : i32
    %c0_i32_1 = arith.constant 0 : i32
    return %c0_i32, %c0_i32_0 : i32, i32
  }
  func.func @transform_12(%arg0: i32) -> (i32, i32) {
    %c0_i32 = arith.constant 0 : i32
    %c0_i32_0 = arith.constant 0 : i32
    %c0_i32_1 = arith.constant 0 : i32
    return %c0_i32, %c0_i32_0 : i32, i32
  }
  func.func @transform_13(%arg0: i32) -> (i32, i32) {
    %c0_i32 = arith.constant 0 : i32
    %c0_i32_0 = arith.constant 0 : i32
    %c0_i32_1 = arith.constant 0 : i32
    return %c0_i32, %c0_i32_0 : i32, i32
  }
  func.func @transform_14(%arg0: i32) -> (i32, i32, i32) {
    %c0_i32 = arith.constant 0 : i32
    %c0_i32_0 = arith.constant 0 : i32
    %c0_i32_1 = arith.constant 0 : i32
    return %arg0, %c0_i32, %c0_i32_0 : i32, i32, i32
  }
}

</mosaic_0001>

<llo_original>
// kernel: tpu_custom_call.1
$region0: #{tpu_custom_call.1}
  #allocation0 [shape = 'u32[]', space=smem, size = 0x4, offset = 0x4, fixed_abs, tag = 'smem constant byte address 0x4 - core index']
  #allocation1 [shape = 'u32[144,128]{1,0:T(1,128)}', space=vmem, size = 0x12000, scoped, tag = 'internal scratch']
  %s0 = inlined_call_operand.vmem [shape: f32[2,32,256], index: 0, kind: input, shape index: {}]
  %s1 = inlined_call_operand.vmem [shape: s32[1,256], index: 1, kind: input, shape index: {}]
  %s2 = inlined_call_operand.vmem [shape: bf16[3,32,96], index: 2, kind: input, shape index: {}]
  %s3 = inlined_call_operand.vmem [shape: f32[32,1], index: 3, kind: input, shape index: {}]
  %s4 = inlined_call_operand.vmem [shape: f32[32,1], index: 4, kind: input, shape index: {}]
  %s5 = inlined_call_operand.vmem [shape: f32[32,1], index: 5, kind: input, shape index: {}]
  %s6 = inlined_call_operand.vmem [shape: bf16[3,32,96], index: 6, kind: input, shape index: {}]
  %s7 = inlined_call_operand.vmem [shape: f32[32,1], index: 7, kind: input, shape index: {}]
  %s8 = inlined_call_operand.vmem [shape: f32[32,1], index: 8, kind: input, shape index: {}]
  %s9 = inlined_call_operand.vmem [shape: f32[32,1], index: 9, kind: input, shape index: {}]
  %s10 = inlined_call_operand.vmem [shape: f32[32,8], index: 10, kind: input, shape index: {}]
  %s11 = inlined_call_operand.vmem [shape: f32[1,8], index: 11, kind: input, shape index: {}]
  %s12 = inlined_call_operand.vmem [shape: f32[32,8], index: 12, kind: input, shape index: {}]
  %s13 = inlined_call_operand.vmem [shape: f32[32,1], index: 13, kind: input, shape index: {}]
  %s14 = inlined_call_operand.hbm [shape: f32[2,32,256], index: 14, kind: output, shape index: {}]
  %s15 = sld [smem:[#allocation0]]
  $region89: #{tpu_custom_call.1} parent=0
    _
  %s17 = ssub.s32 1, %s15
  %s18 = scalar_select 0, %s17, %s15
  $region1: #{tpu_custom_call.1} parent=0
    #allocation2 [shape = 'u8[65536]{0}', space=vmem, size = 0x10000, scoped, tag = 'output window, operand 0']
    #allocation3 [shape = 's32[2]{0}', space=sflag, size = 0x8, scoped, tag = 'scoped memory for tpu_custom_call.1']
    %19 = vsyncpa [#allocation3], 0
    %s20 = scalar_lea.sflag [#allocation3], 1
    %21 = vsyncpa %s20, 0
    loop: start=0, step=1, limit=4
    $region2: #{tpu_custom_call.1} parent=1 // loop_pre_header
      _
    $region3: #{tpu_custom_call.1} parent=1 // loop_header
      %s23 = sphi 0, %s27
      %p24 = scmp.ge.s32.totalorder %s23, 4
      %s33 = sphi 0, %s35
      %s36 = sphi 0, %s33
      %s37 = sphi 0, %s36
      %s53 = sphi 0, %s37
      %s57 = sphi 0, %s57
      %s59 = sphi 0, %s57
      %s60 = sphi 0, %s59
      %s74 = sphi 0, %s60
      %s78 = sphi 0, %s78
      %s80 = sphi 0, %s78
      %s81 = sphi 0, %s80
      %s95 = sphi 0, %s81
      %s99 = sphi 0, %s99
      %s101 = sphi 0, %s99
      %s102 = sphi 0, %s101
      %s116 = sphi 0, %s102
      %s120 = sphi 0, %s120
      %s122 = sphi 0, %s120
      %s123 = sphi 0, %s122
      %s137 = sphi 0, %s123
      %s141 = sphi 0, %s141
      %s143 = sphi 0, %s141
      %s144 = sphi 0, %s143
      %s158 = sphi 0, %s144
      %s162 = sphi 0, %s162
      %s164 = sphi 0, %s162
      %s165 = sphi 0, %s164
      %s179 = sphi 0, %s165
      %s183 = sphi 0, %s183
      %s185 = sphi 0, %s183
      %s186 = sphi 0, %s185
      %s200 = sphi 0, %s186
      %s204 = sphi 0, %s204
      %s206 = sphi 0, %s204
      %s207 = sphi 0, %s206
      %s221 = sphi 0, %s207
      %s225 = sphi 0, %s225
      %s227 = sphi 0, %s225
      %s228 = sphi 0, %s227
      %s242 = sphi 0, %s228
      %s246 = sphi 0, %s246
      %s248 = sphi 0, %s246
      %s249 = sphi 0, %s248
      %s263 = sphi 0, %s249
      %s267 = sphi 0, %s267
      %s269 = sphi 0, %s267
      %s270 = sphi 0, %s269
      %s284 = sphi 0, %s270
      %s288 = sphi 0, %s288
      %s290 = sphi 0, %s288
      %s291 = sphi 0, %s290
      %s305 = sphi 0, %s291
      %s309 = sphi 0, %s309
      %s311 = sphi 0, %s309
      %s312 = sphi 0, %s311
      %s326 = sphi 0, %s312
      %s332 = sphi 0, %s334
      %s335 = sphi 0, %s332
      %s336 = sphi 0, %s335
      %s352 = sphi 0, %s336
    $region4: #{tpu_custom_call.1} parent=1 // loop_header_branch
      %26 = sbr.rel (%p24) target = $region8
    $region5: #{tpu_custom_call.1} parent=1 // loop_body
      %s28 = ssub.s32 %s23, 1
      %s29 = ssub.s32 %s23, 2
      %s30 = sadd.s32 %s23, 1
      %s31 = ssub.s32 %s23, %s30
      %p32 = scmp.eq.s32.totalorder %s31, 0
      %s34 = sadd.s32 %s33, 1
      %s35 = scalar_select %p32, %s33, %s34
      %p38 = pneg %p32
      %p39 = scmp.eq.s32.totalorder %s23, 1
      %p40 = por %p38, %p39
      %p41 = scmp.ne.s32.totalorder %s33, %s36
      %p42 = scmp.eq.s32.totalorder %s23, 0
      %p43 = por %p41, %p42
      %p44 = scmp.ne.s32.totalorder %s33, %s36
      %p45 = scmp.eq.s32.totalorder %s28, 1
      %p46 = por %p44, %p45
      %p47 = scmp.ne.s32.totalorder %s36, %s37
      %p48 = scmp.eq.s32.totalorder %s28, 0
      %p49 = por %p47, %p48
      %p50 = scmp.ne.s32.totalorder %s36, %s37
      %p51 = scmp.eq.s32.totalorder %s29, 1
      %p52 = por %p50, %p51
      %p54 = scmp.ne.s32.totalorder %s37, %s53
      %p55 = scmp.eq.s32.totalorder %s29, 0
      %p56 = por %p54, %p55
      %s58 = sadd.s32 %s57, 1
      %p61 = scmp.eq.s32.totalorder %s23, 1
      %p62 = scmp.ne.s32.totalorder %s57, %s59
      %p63 = scmp.eq.s32.totalorder %s23, 0
      %p64 = por %p62, %p63
      %p65 = scmp.ne.s32.totalorder %s57, %s59
      %p66 = scmp.eq.s32.totalorder %s28, 1
      %p67 = por %p65, %p66
      %p68 = scmp.ne.s32.totalorder %s59, %s60
      %p69 = scmp.eq.s32.totalorder %s28, 0
      %p70 = por %p68, %p69
      %p71 = scmp.ne.s32.totalorder %s59, %s60
      %p72 = scmp.eq.s32.totalorder %s29, 1
      %p73 = por %p71, %p72
      %p75 = scmp.ne.s32.totalorder %s60, %s74
      %p76 = scmp.eq.s32.totalorder %s29, 0
      %p77 = por %p75, %p76
      %s79 = sadd.s32 %s78, 1
      %p82 = scmp.eq.s32.totalorder %s23, 1
      %p83 = scmp.ne.s32.totalorder %s78, %s80
      %p84 = scmp.eq.s32.totalorder %s23, 0
      %p85 = por %p83, %p84
      %p86 = scmp.ne.s32.totalorder %s78, %s80
      %p87 = scmp.eq.s32.totalorder %s28, 1
      %p88 = por %p86, %p87
      %p89 = scmp.ne.s32.totalorder %s80, %s81
      %p90 = scmp.eq.s32.totalorder %s28, 0
      %p91 = por %p89, %p90
      %p92 = scmp.ne.s32.totalorder %s80, %s81
      %p93 = scmp.eq.s32.totalorder %s29, 1
      %p94 = por %p92, %p93
      %p96 = scmp.ne.s32.totalorder %s81, %s95
      %p97 = scmp.eq.s32.totalorder %s29, 0
      %p98 = por %p96, %p97
      %s100 = sadd.s32 %s99, 1
      %p103 = scmp.eq.s32.totalorder %s23, 1
      %p104 = scmp.ne.s32.totalorder %s99, %s101
      %p105 = scmp.eq.s32.totalorder %s23, 0
      %p106 = por %p104, %p105
      %p107 = scmp.ne.s32.totalorder %s99, %s101
      %p108 = scmp.eq.s32.totalorder %s28, 1
      %p109 = por %p107, %p108
      %p110 = scmp.ne.s32.totalorder %s101, %s102
      %p111 = scmp.eq.s32.totalorder %s28, 0
      %p112 = por %p110, %p111
      %p113 = scmp.ne.s32.totalorder %s101, %s102
      %p114 = scmp.eq.s32.totalorder %s29, 1
      %p115 = por %p113, %p114
      %p117 = scmp.ne.s32.totalorder %s102, %s116
      %p118 = scmp.eq.s32.totalorder %s29, 0
      %p119 = por %p117, %p118
      %s121 = sadd.s32 %s120, 1
      %p124 = scmp.eq.s32.totalorder %s23, 1
      %p125 = scmp.ne.s32.totalorder %s120, %s122
      %p126 = scmp.eq.s32.totalorder %s23, 0
      %p127 = por %p125, %p126
      %p128 = scmp.ne.s32.totalorder %s120, %s122
      %p129 = scmp.eq.s32.totalorder %s28, 1
      %p130 = por %p128, %p129
      %p131 = scmp.ne.s32.totalorder %s122, %s123
      %p132 = scmp.eq.s32.totalorder %s28, 0
      %p133 = por %p131, %p132
      %p134 = scmp.ne.s32.totalorder %s122, %s123
      %p135 = scmp.eq.s32.totalorder %s29, 1
      %p136 = por %p134, %p135
      %p138 = scmp.ne.s32.totalorder %s123, %s137
      %p139 = scmp.eq.s32.totalorder %s29, 0
      %p140 = por %p138, %p139
      %s142 = sadd.s32 %s141, 1
      %p145 = scmp.eq.s32.totalorder %s23, 1
      %p146 = scmp.ne.s32.totalorder %s141, %s143
      %p147 = scmp.eq.s32.totalorder %s23, 0
      %p148 = por %p146, %p147
      %p149 = scmp.ne.s32.totalorder %s141, %s143
      %p150 = scmp.eq.s32.totalorder %s28, 1
      %p151 = por %p149, %p150
      %p152 = scmp.ne.s32.totalorder %s143, %s144
      %p153 = scmp.eq.s32.totalorder %s28, 0
      %p154 = por %p152, %p153
      %p155 = scmp.ne.s32.totalorder %s143, %s144
      %p156 = scmp.eq.s32.totalorder %s29, 1
      %p157 = por %p155, %p156
      %p159 = scmp.ne.s32.totalorder %s144, %s158
      %p160 = scmp.eq.s32.totalorder %s29, 0
      %p161 = por %p159, %p160
      %s163 = sadd.s32 %s162, 1
      %p166 = scmp.eq.s32.totalorder %s23, 1
      %p167 = scmp.ne.s32.totalorder %s162, %s164
      %p168 = scmp.eq.s32.totalorder %s23, 0
      %p169 = por %p167, %p168
      %p170 = scmp.ne.s32.totalorder %s162, %s164
      %p171 = scmp.eq.s32.totalorder %s28, 1
      %p172 = por %p170, %p171
      %p173 = scmp.ne.s32.totalorder %s164, %s165
      %p174 = scmp.eq.s32.totalorder %s28, 0
      %p175 = por %p173, %p174
      %p176 = scmp.ne.s32.totalorder %s164, %s165
      %p177 = scmp.eq.s32.totalorder %s29, 1
      %p178 = por %p176, %p177
      %p180 = scmp.ne.s32.totalorder %s165, %s179
      %p181 = scmp.eq.s32.totalorder %s29, 0
      %p182 = por %p180, %p181
      %s184 = sadd.s32 %s183, 1
      %p187 = scmp.eq.s32.totalorder %s23, 1
      %p188 = scmp.ne.s32.totalorder %s183, %s185
      %p189 = scmp.eq.s32.totalorder %s23, 0
      %p190 = por %p188, %p189
      %p191 = scmp.ne.s32.totalorder %s183, %s185
      %p192 = scmp.eq.s32.totalorder %s28, 1
      %p193 = por %p191, %p192
      %p194 = scmp.ne.s32.totalorder %s185, %s186
      %p195 = scmp.eq.s32.totalorder %s28, 0
      %p196 = por %p194, %p195
      %p197 = scmp.ne.s32.totalorder %s185, %s186
      %p198 = scmp.eq.s32.totalorder %s29, 1
      %p199 = por %p197, %p198
      %p201 = scmp.ne.s32.totalorder %s186, %s200
      %p202 = scmp.eq.s32.totalorder %s29, 0
      %p203 = por %p201, %p202
      %s205 = sadd.s32 %s204, 1
      %p208 = scmp.eq.s32.totalorder %s23, 1
      %p209 = scmp.ne.s32.totalorder %s204, %s206
      %p210 = scmp.eq.s32.totalorder %s23, 0
      %p211 = por %p209, %p210
      %p212 = scmp.ne.s32.totalorder %s204, %s206
      %p213 = scmp.eq.s32.totalorder %s28, 1
      %p214 = por %p212, %p213
      %p215 = scmp.ne.s32.totalorder %s206, %s207
      %p216 = scmp.eq.s32.totalorder %s28, 0
      %p217 = por %p215, %p216
      %p218 = scmp.ne.s32.totalorder %s206, %s207
      %p219 = scmp.eq.s32.totalorder %s29, 1
      %p220 = por %p218, %p219
      %p222 = scmp.ne.s32.totalorder %s207, %s221
      %p223 = scmp.eq.s32.totalorder %s29, 0
      %p224 = por %p222, %p223
      %s226 = sadd.s32 %s225, 1
      %p229 = scmp.eq.s32.totalorder %s23, 1
      %p230 = scmp.ne.s32.totalorder %s225, %s227
      %p231 = scmp.eq.s32.totalorder %s23, 0
      %p232 = por %p230, %p231
      %p233 = scmp.ne.s32.totalorder %s225, %s227
      %p234 = scmp.eq.s32.totalorder %s28, 1
      %p235 = por %p233, %p234
      %p236 = scmp.ne.s32.totalorder %s227, %s228
      %p237 = scmp.eq.s32.totalorder %s28, 0
      %p238 = por %p236, %p237
      %p239 = scmp.ne.s32.totalorder %s227, %s228
      %p240 = scmp.eq.s32.totalorder %s29, 1
      %p241 = por %p239, %p240
      %p243 = scmp.ne.s32.totalorder %s228, %s242
      %p244 = scmp.eq.s32.totalorder %s29, 0
      %p245 = por %p243, %p244
      %s247 = sadd.s32 %s246, 1
      %p250 = scmp.eq.s32.totalorder %s23, 1
      %p251 = scmp.ne.s32.totalorder %s246, %s248
      %p252 = scmp.eq.s32.totalorder %s23, 0
      %p253 = por %p251, %p252
      %p254 = scmp.ne.s32.totalorder %s246, %s248
      %p255 = scmp.eq.s32.totalorder %s28, 1
      %p256 = por %p254, %p255
      %p257 = scmp.ne.s32.totalorder %s248, %s249
      %p258 = scmp.eq.s32.totalorder %s28, 0
      %p259 = por %p257, %p258
      %p260 = scmp.ne.s32.totalorder %s248, %s249
      %p261 = scmp.eq.s32.totalorder %s29, 1
      %p262 = por %p260, %p261
      %p264 = scmp.ne.s32.totalorder %s249, %s263
      %p265 = scmp.eq.s32.totalorder %s29, 0
      %p266 = por %p264, %p265
      %s268 = sadd.s32 %s267, 1
      %p271 = scmp.eq.s32.totalorder %s23, 1
      %p272 = scmp.ne.s32.totalorder %s267, %s269
      %p273 = scmp.eq.s32.totalorder %s23, 0
      %p274 = por %p272, %p273
      %p275 = scmp.ne.s32.totalorder %s267, %s269
      %p276 = scmp.eq.s32.totalorder %s28, 1
      %p277 = por %p275, %p276
      %p278 = scmp.ne.s32.totalorder %s269, %s270
      %p279 = scmp.eq.s32.totalorder %s28, 0
      %p280 = por %p278, %p279
      %p281 = scmp.ne.s32.totalorder %s269, %s270
      %p282 = scmp.eq.s32.totalorder %s29, 1
      %p283 = por %p281, %p282
      %p285 = scmp.ne.s32.totalorder %s270, %s284
      %p286 = scmp.eq.s32.totalorder %s29, 0
      %p287 = por %p285, %p286
      %s289 = sadd.s32 %s288, 1
      %p292 = scmp.eq.s32.totalorder %s23, 1
      %p293 = scmp.ne.s32.totalorder %s288, %s290
      %p294 = scmp.eq.s32.totalorder %s23, 0
      %p295 = por %p293, %p294
      %p296 = scmp.ne.s32.totalorder %s288, %s290
      %p297 = scmp.eq.s32.totalorder %s28, 1
      %p298 = por %p296, %p297
      %p299 = scmp.ne.s32.totalorder %s290, %s291
      %p300 = scmp.eq.s32.totalorder %s28, 0
      %p301 = por %p299, %p300
      %p302 = scmp.ne.s32.totalorder %s290, %s291
      %p303 = scmp.eq.s32.totalorder %s29, 1
      %p304 = por %p302, %p303
      %p306 = scmp.ne.s32.totalorder %s291, %s305
      %p307 = scmp.eq.s32.totalorder %s29, 0
      %p308 = por %p306, %p307
      %s310 = sadd.s32 %s309, 1
      %p313 = scmp.eq.s32.totalorder %s23, 1
      %p314 = scmp.ne.s32.totalorder %s309, %s311
      %p315 = scmp.eq.s32.totalorder %s23, 0
      %p316 = por %p314, %p315
      %p317 = scmp.ne.s32.totalorder %s309, %s311
      %p318 = scmp.eq.s32.totalorder %s28, 1
      %p319 = por %p317, %p318
      %p320 = scmp.ne.s32.totalorder %s311, %s312
      %p321 = scmp.eq.s32.totalorder %s28, 0
      %p322 = por %p320, %p321
      %p323 = scmp.ne.s32.totalorder %s311, %s312
      %p324 = scmp.eq.s32.totalorder %s29, 1
      %p325 = por %p323, %p324
      %p327 = scmp.ne.s32.totalorder %s312, %s326
      %p328 = scmp.eq.s32.totalorder %s29, 0
      %p329 = por %p327, %p328
      %s330 = ssub.s32 %s23, %s30
      %p331 = scmp.eq.s32.totalorder %s330, 0
      %s333 = sadd.s32 %s332, 1
      %s334 = scalar_select %p331, %s332, %s333
      %p337 = pneg %p331
      %p338 = scmp.eq.s32.totalorder %s23, 1
      %p339 = por %p337, %p338
      %p340 = scmp.ne.s32.totalorder %s332, %s335
      %p341 = scmp.eq.s32.totalorder %s23, 0
      %p342 = por %p340, %p341
      %p343 = scmp.ne.s32.totalorder %s332, %s335
      %p344 = scmp.eq.s32.totalorder %s28, 1
      %p345 = por %p343, %p344
      %p346 = scmp.ne.s32.totalorder %s335, %s336
      %p347 = scmp.eq.s32.totalorder %s28, 0
      %p348 = por %p346, %p347
      %p349 = scmp.ne.s32.totalorder %s335, %s336
      %p350 = scmp.eq.s32.totalorder %s29, 1
      %p351 = por %p349, %p350
      %p353 = scmp.ne.s32.totalorder %s336, %s352
      %p354 = scmp.eq.s32.totalorder %s29, 0
      %p355 = por %p353, %p354
      %p356 = scmp.le.s32.totalorder 1, %s23
      %p357 = scmp.lt.s32.totalorder %s23, 3
      %p358 = pnand %p356, %p357
      %p359 = pneg %p358
      // Predicated region
      $region9: #{tpu_custom_call.1} parent=5 // pred_check
        _
      $region10: #{tpu_custom_call.1} parent=5 // pred_check_branch
        %361 = sbr.rel (%p358) target = $region12
      $region11: #{tpu_custom_call.1} parent=5 // pred_region
        %s362 = ssub.s32 %s23, 1
        // Predicated region
        $region13: #{tpu_custom_call.1} parent=11 // pred_check
          %p363 = pneg %p70
        $region14: #{tpu_custom_call.1} parent=11 // pred_check_branch
          %365 = sbr.rel (%p363) target = $region16
        $region15: #{tpu_custom_call.1} parent=11 // pred_region
          _
        $region16: #{tpu_custom_call.1} parent=11 // pred_fallthru
          _
        // Predicated region
        $region17: #{tpu_custom_call.1} parent=11 // pred_check
          %p366 = pneg %p91
        $region18: #{tpu_custom_call.1} parent=11 // pred_check_branch
          %368 = sbr.rel (%p366) target = $region20
        $region19: #{tpu_custom_call.1} parent=11 // pred_region
          _
        $region20: #{tpu_custom_call.1} parent=11 // pred_fallthru
          _
        // Predicated region
        $region21: #{tpu_custom_call.1} parent=11 // pred_check
          %p369 = pneg %p112
        $region22: #{tpu_custom_call.1} parent=11 // pred_check_branch
          %371 = sbr.rel (%p369) target = $region24
        $region23: #{tpu_custom_call.1} parent=11 // pred_region
          _
        $region24: #{tpu_custom_call.1} parent=11 // pred_fallthru
          _
        // Predicated region
        $region25: #{tpu_custom_call.1} parent=11 // pred_check
          %p372 = pneg %p133
        $region26: #{tpu_custom_call.1} parent=11 // pred_check_branch
          %374 = sbr.rel (%p372) target = $region28
        $region27: #{tpu_custom_call.1} parent=11 // pred_region
          _
        $region28: #{tpu_custom_call.1} parent=11 // pred_fallthru
          _
        // Predicated region
        $region29: #{tpu_custom_call.1} parent=11 // pred_check
          %p375 = pneg %p154
        $region30: #{tpu_custom_call.1} parent=11 // pred_check_branch
          %377 = sbr.rel (%p375) target = $region32
        $region31: #{tpu_custom_call.1} parent=11 // pred_region
          _
        $region32: #{tpu_custom_call.1} parent=11 // pred_fallthru
          _
        // Predicated region
        $region33: #{tpu_custom_call.1} parent=11 // pred_check
          %p378 = pneg %p175
        $region34: #{tpu_custom_call.1} parent=11 // pred_check_branch
          %380 = sbr.rel (%p378) target = $region36
        $region35: #{tpu_custom_call.1} parent=11 // pred_region
          _
        $region36: #{tpu_custom_call.1} parent=11 // pred_fallthru
          _
        // Predicated region
        $region37: #{tpu_custom_call.1} parent=11 // pred_check
          %p381 = pneg %p196
        $region38: #{tpu_custom_call.1} parent=11 // pred_check_branch
          %383 = sbr.rel (%p381) target = $region40
        $region39: #{tpu_custom_call.1} parent=11 // pred_region
          _
        $region40: #{tpu_custom_call.1} parent=11 // pred_fallthru
          _
        // Predicated region
        $region41: #{tpu_custom_call.1} parent=11 // pred_check
          %p384 = pneg %p217
        $region42: #{tpu_custom_call.1} parent=11 // pred_check_branch
          %386 = sbr.rel (%p384) target = $region44
        $region43: #{tpu_custom_call.1} parent=11 // pred_region
          _
        $region44: #{tpu_custom_call.1} parent=11 // pred_fallthru
          _
        // Predicated region
        $region45: #{tpu_custom_call.1} parent=11 // pred_check
          %p387 = pneg %p238
        $region46: #{tpu_custom_call.1} parent=11 // pred_check_branch
          %389 = sbr.rel (%p387) target = $region48
        $region47: #{tpu_custom_call.1} parent=11 // pred_region
          _
        $region48: #{tpu_custom_call.1} parent=11 // pred_fallthru
          _
        // Predicated region
        $region49: #{tpu_custom_call.1} parent=11 // pred_check
          %p390 = pneg %p259
        $region50: #{tpu_custom_call.1} parent=11 // pred_check_branch
          %392 = sbr.rel (%p390) target = $region52
        $region51: #{tpu_custom_call.1} parent=11 // pred_region
          _
        $region52: #{tpu_custom_call.1} parent=11 // pred_fallthru
          _
        // Predicated region
        $region53: #{tpu_custom_call.1} parent=11 // pred_check
          %p393 = pneg %p280
        $region54: #{tpu_custom_call.1} parent=11 // pred_check_branch
          %395 = sbr.rel (%p393) target = $region56
        $region55: #{tpu_custom_call.1} parent=11 // pred_region
          _
        $region56: #{tpu_custom_call.1} parent=11 // pred_fallthru
          _
        // Predicated region
        $region57: #{tpu_custom_call.1} parent=11 // pred_check
          %p396 = pneg %p301
        $region58: #{tpu_custom_call.1} parent=11 // pred_check_branch
          %398 = sbr.rel (%p396) target = $region60
        $region59: #{tpu_custom_call.1} parent=11 // pred_region
          _
        $region60: #{tpu_custom_call.1} parent=11 // pred_fallthru
          _
        // Predicated region
        $region61: #{tpu_custom_call.1} parent=11 // pred_check
          %p399 = pneg %p322
        $region62: #{tpu_custom_call.1} parent=11 // pred_check_branch
          %401 = sbr.rel (%p399) target = $region64
        $region63: #{tpu_custom_call.1} parent=11 // pred_region
          _
        $region64: #{tpu_custom_call.1} parent=11 // pred_fallthru
          _
      $region12: #{tpu_custom_call.1} parent=5 // pred_fallthru
        _
      %p402 = scmp.lt.s32.totalorder %s23, 2
      // Predicated region
      $region65: #{tpu_custom_call.1} parent=5 // pred_check
        %p403 = pneg %p402
      $region66: #{tpu_custom_call.1} parent=5 // pred_check_branch
        %405 = sbr.rel (%p403) target = $region68
      $region67: #{tpu_custom_call.1} parent=5 // pred_region
        // Predicated region
        $region69: #{tpu_custom_call.1} parent=67 // pred_check
          %p406 = pneg %p43
        $region70: #{tpu_custom_call.1} parent=67 // pred_check_branch
          %408 = sbr.rel (%p406) target = $region72
        $region71: #{tpu_custom_call.1} parent=67 // pred_region
          %p409 = scmp.lt.s32.totalorder %s23, 1
          %s410 = scalar_select %p409, %s23, 1
          %s411 = smul.addr %s410, 8
          %s412 = smul.addr %s411, 8
          %s413 = scalar_lea.vmem %s0, %s412
        $region72: #{tpu_custom_call.1} parent=67 // pred_fallthru
          _
      $region68: #{tpu_custom_call.1} parent=5 // pred_fallthru
        _
      %p414 = scmp.le.s32.totalorder 1, %s23
      %p415 = scmp.lt.s32.totalorder %s23, 3
      %p416 = pnand %p414, %p415
      %p417 = pneg %p416
      // Predicated region
      $region73: #{tpu_custom_call.1} parent=5 // pred_check
        _
      $region74: #{tpu_custom_call.1} parent=5 // pred_check_branch
        %419 = sbr.rel (%p416) target = $region76
      $region75: #{tpu_custom_call.1} parent=5 // pred_region
        %s420 = ssub.s32 %s23, 1
        %p421 = scmp.lt.s32.totalorder %s28, 1
        %s422 = scalar_select %p421, %s28, 1
        %s423 = smul.addr %s422, 8
        %s424 = smul.addr %s423, 8
        %s425 = scalar_lea.vmem %s0, %s424
        %p426 = pneg %p49
        %p427 = pneg %p46
        %p428 = pneg %p70
        %p429 = pneg %p67
        %p430 = pneg %p91
        %p431 = pneg %p88
        %p432 = pneg %p112
        %p433 = pneg %p109
        %p434 = pneg %p133
        %p435 = pneg %p130
        %p436 = pneg %p154
        %p437 = pneg %p151
        %p438 = pneg %p175
        %p439 = pneg %p172
        %p440 = pneg %p196
        %p441 = pneg %p193
        %p442 = pneg %p217
        %p443 = pneg %p214
        %p444 = pneg %p238
        %p445 = pneg %p235
        %p446 = pneg %p259
        %p447 = pneg %p256
        %p448 = pneg %p280
        %p449 = pneg %p277
        %p450 = pneg %p301
        %p451 = pneg %p298
        %p452 = pneg %p322
        %p453 = pneg %p319
        %p454 = pneg %p348
        %p455 = pneg %p345
        %s456 = sand.u32 %s335, 1
        %s457 = scalar_lea.sflag [#allocation3], %s456
        %s458 = sand.u32 %s335, 1
        %s459 = smul.addr %s458, 64
        %s460 = scalar_lea.vmem [#allocation2], %s459
        %p461 = scmp.lt.s32.totalorder %s28, 1
        %s462 = scalar_select %p461, %s28, 1
        %s463 = smul.addr %s462, 8
        %s464 = smul.addr %s463, 8
        %s465 = scalar_lea.vmem %s0, %s464
        %v467 = vld [vmem:[%s1] sm:$0x3]
        %v468 = vlaneseq
        %v469 = vand.u32 %v468, 127
        %v470 = vadd.s32 %v469, 128
        %vm471 = vcmp.ge.s32.totalorder %v467, 1
        %vm472 = vcmp.le.s32.totalorder %v467, 14
        %vm473 = vcmp.ge.s32.totalorder %v469, 16
        %vm474 = vcmp.ge.s32.totalorder %v470, 16
        %vm475 = vcmp.lt.s32.totalorder %v469, 240
        %vm476 = vcmp.lt.s32.totalorder %v470, 240
        %v477 = vld [vmem:[%s465] sm:$0xff]
        %v478 = vld [vmem:[%s465 + $0x8] sm:$0xff]
        %v479 = vld [vmem:[%s465 + $0x10] sm:$0xff]
        %v480 = vld [vmem:[%s465 + $0x18] sm:$0xff]
        %v481 = vld [vmem:[%s465 + $0x20] sm:$0xff]
        %v482 = vld [vmem:[%s465 + $0x28] sm:$0xff]
        %v483 = vld [vmem:[%s465 + $0x30] sm:$0xff]
        %v484 = vld [vmem:[%s465 + $0x38] sm:$0xff]
        %485 = vrot.lane.b32.xlu0 %v477, 1
        %v486 = vpop.permute.xlu0 %485
        %487 = vrot.lane.b32.xlu0 %v479, 1
        %v488 = vpop.permute.xlu0 %487
        %489 = vrot.lane.b32.xlu0 %v481, 1
        %v490 = vpop.permute.xlu0 %489
        %491 = vrot.lane.b32.xlu0 %v483, 1
        %v492 = vpop.permute.xlu0 %491
        %493 = vrot.lane.b32.xlu0 %v478, 1
        %v494 = vpop.permute.xlu0 %493
        %495 = vrot.lane.b32.xlu0 %v480, 1
        %v496 = vpop.permute.xlu0 %495
        %497 = vrot.lane.b32.xlu0 %v482, 1
        %v498 = vpop.permute.xlu0 %497
        %499 = vrot.lane.b32.xlu0 %v484, 1
        %v500 = vpop.permute.xlu0 %499
        %vm501 = vcmp.lt.s32.totalorder %v469, 1
        %v502 = vsel %vm501, %v486, %v494
        %v503 = vsel %vm501, %v488, %v496
        %v504 = vsel %vm501, %v490, %v498
        %v505 = vsel %vm501, %v492, %v500
        %v506 = vsel %vm501, %v494, %v486
        %v507 = vsel %vm501, %v496, %v488
        %v508 = vsel %vm501, %v498, %v490
        %v509 = vsel %vm501, %v500, %v492
        %v510 = vsel %vm471, 1, 0
        %v511 = vlaneseq
        %v512 = vshrl.u32 %v511, 7
        %v513 = vsub.s32 0, %v512
        %v514 = vrot.slane %v510, %v513
        %v515 = vlaneseq
        %v516 = vshrl.u32 %v515, 7
        %v517 = vsub.s32 1, %v516
        %v518 = vrot.slane %v510, %v517
        %vm519 = vcmp.eq.s32.totalorder %v514, 1
        %vm520 = vcmp.eq.s32.totalorder %v518, 1
        %v521 = vsel %vm519, %v506, 0.0
        %v522 = vsel %vm520, %v502, 0.0
        %v523 = vsel %vm519, %v507, 0.0
        %v524 = vsel %vm520, %v503, 0.0
        %v525 = vsel %vm519, %v508, 0.0
        %v526 = vsel %vm520, %v504, 0.0
        %v527 = vsel %vm519, %v509, 0.0
        %v528 = vsel %vm520, %v505, 0.0
        %529 = vrot.lane.b32.xlu0 %v521, 16
        %v530 = vpop.permute.xlu0 %529
        %531 = vrot.lane.b32.xlu0 %v523, 16
        %v532 = vpop.permute.xlu0 %531
        %533 = vrot.lane.b32.xlu0 %v525, 16
        %v534 = vpop.permute.xlu0 %533
        %535 = vrot.lane.b32.xlu0 %v527, 16
        %v536 = vpop.permute.xlu0 %535
        %537 = vrot.lane.b32.xlu0 %v522, 16
        %v538 = vpop.permute.xlu0 %537
        %539 = vrot.lane.b32.xlu0 %v524, 16
        %v540 = vpop.permute.xlu0 %539
        %541 = vrot.lane.b32.xlu0 %v526, 16
        %v542 = vpop.permute.xlu0 %541
        %543 = vrot.lane.b32.xlu0 %v528, 16
        %v544 = vpop.permute.xlu0 %543
        %vm545 = vcmp.lt.s32.totalorder %v469, 16
        %v546 = vsel %vm545, %v530, %v538
        %v547 = vsel %vm545, %v532, %v540
        %v548 = vsel %vm545, %v534, %v542
        %v549 = vsel %vm545, %v536, %v544
        %v550 = vsel %vm545, %v538, %v530
        %v551 = vsel %vm545, %v540, %v532
        %v552 = vsel %vm545, %v542, %v534
        %v553 = vsel %vm545, %v544, %v536
        %v554 = vsel %vm473, 1, 0
        %v555 = vsel %vm474, 1, 0
        %vm556 = vcmp.eq.s32.totalorder %v554, 1
        %vm557 = vcmp.eq.s32.totalorder %v555, 1
        %v558 = vsel %vm556, %v550, 0.0
        %v559 = vsel %vm557, %v546, 0.0
        %v560 = vsel %vm556, %v551, 0.0
        %v561 = vsel %vm557, %v547, 0.0
        %v562 = vsel %vm556, %v552, 0.0
        %v563 = vsel %vm557, %v548, 0.0
        %v564 = vsel %vm556, %v553, 0.0
        %v565 = vsel %vm557, %v549, 0.0
        %566 = vrot.lane.b32.xlu0 %v521, 112
        %v567 = vpop.permute.xlu0 %566
        %568 = vrot.lane.b32.xlu0 %v523, 112
        %v569 = vpop.permute.xlu0 %568
        %570 = vrot.lane.b32.xlu0 %v525, 112
        %v571 = vpop.permute.xlu0 %570
        %572 = vrot.lane.b32.xlu0 %v527, 112
        %v573 = vpop.permute.xlu0 %572
        %574 = vrot.lane.b32.xlu0 %v522, 112
        %v575 = vpop.permute.xlu0 %574
        %576 = vrot.lane.b32.xlu0 %v524, 112
        %v577 = vpop.permute.xlu0 %576
        %578 = vrot.lane.b32.xlu0 %v526, 112
        %v579 = vpop.permute.xlu0 %578
        %580 = vrot.lane.b32.xlu0 %v528, 112
        %v581 = vpop.permute.xlu0 %580
        %vm582 = vcmp.lt.s32.totalorder %v469, 112
        %v583 = vsel %vm582, %v567, %v575
        %v584 = vsel %vm582, %v569, %v577
        %v585 = vsel %vm582, %v571, %v579
        %v586 = vsel %vm582, %v573, %v581
        %v587 = vsel %vm582, %v575, %v567
        %v588 = vsel %vm582, %v577, %v569
        %v589 = vsel %vm582, %v579, %v571
        %v590 = vsel %vm582, %v581, %v573
        %v591 = vsel %vm475, 1, 0
        %v592 = vsel %vm476, 1, 0
        %vm593 = vcmp.eq.s32.totalorder %v591, 1
        %vm594 = vcmp.eq.s32.totalorder %v592, 1
        %v595 = vsel %vm593, %v583, 0.0
        %v596 = vsel %vm594, %v587, 0.0
        %v597 = vsel %vm593, %v584, 0.0
        %v598 = vsel %vm594, %v588, 0.0
        %v599 = vsel %vm593, %v585, 0.0
        %v600 = vsel %vm594, %v589, 0.0
        %v601 = vsel %vm593, %v586, 0.0
        %v602 = vsel %vm594, %v590, 0.0
        %v603 = vpack.c.bf16 %v560, %v558
        %v604 = vpack.c.bf16 %v561, %v559
        %v605 = vpack.c.bf16 %v564, %v562
        %v606 = vpack.c.bf16 %v565, %v563
        %v607 = vpack.c.bf16 %v523, %v521
        %v608 = vpack.c.bf16 %v524, %v522
        %v609 = vpack.c.bf16 %v527, %v525
        %v610 = vpack.c.bf16 %v528, %v526
        %v611 = vpack.c.bf16 %v597, %v595
        %v612 = vpack.c.bf16 %v598, %v596
        %v613 = vpack.c.bf16 %v601, %v599
        %v614 = vpack.c.bf16 %v602, %v600
        %v615 = vld [vmem:[%s2] sm:$0xf]
        %v616 = vld [vmem:[%s2 + $0x4] sm:$0xf]
        %v617 = vld [vmem:[%s2 + $0x8] sm:$0xf]
        %v618 = vld [vmem:[%s2 + $0xc] sm:$0xf]
        %619 = vrot.lane.b32.xlu0 %v477, 16
        %v620 = vpop.permute.xlu0 %619
        %621 = vrot.lane.b32.xlu0 %v479, 16
        %v622 = vpop.permute.xlu0 %621
        %623 = vrot.lane.b32.xlu0 %v481, 16
        %v624 = vpop.permute.xlu0 %623
        %625 = vrot.lane.b32.xlu0 %v483, 16
        %v626 = vpop.permute.xlu0 %625
        %627 = vrot.lane.b32.xlu0 %v478, 16
        %v628 = vpop.permute.xlu0 %627
        %629 = vrot.lane.b32.xlu0 %v480, 16
        %v630 = vpop.permute.xlu0 %629
        %631 = vrot.lane.b32.xlu0 %v482, 16
        %v632 = vpop.permute.xlu0 %631
        %633 = vrot.lane.b32.xlu0 %v484, 16
        %v634 = vpop.permute.xlu0 %633
        %v635 = vsel %vm545, %v620, %v628
        %v636 = vsel %vm545, %v622, %v630
        %v637 = vsel %vm545, %v624, %v632
        %v638 = vsel %vm545, %v626, %v634
        %v639 = vsel %vm545, %v628, %v620
        %v640 = vsel %vm545, %v630, %v622
        %v641 = vsel %vm545, %v632, %v624
        %v642 = vsel %vm545, %v634, %v626
        %v643 = vsel %vm556, %v639, 0.0
        %v644 = vsel %vm557, %v635, 0.0
        %v645 = vsel %vm556, %v640, 0.0
        %v646 = vsel %vm557, %v636, 0.0
        %v647 = vsel %vm556, %v641, 0.0
        %v648 = vsel %vm557, %v637, 0.0
        %v649 = vsel %vm556, %v642, 0.0
        %v650 = vsel %vm557, %v638, 0.0
        %651 = vrot.lane.b32.xlu0 %v477, 112
        %v652 = vpop.permute.xlu0 %651
        %653 = vrot.lane.b32.xlu0 %v479, 112
        %v654 = vpop.permute.xlu0 %653
        %655 = vrot.lane.b32.xlu0 %v481, 112
        %v656 = vpop.permute.xlu0 %655
        %657 = vrot.lane.b32.xlu0 %v483, 112
        %v658 = vpop.permute.xlu0 %657
        %659 = vrot.lane.b32.xlu0 %v478, 112
        %v660 = vpop.permute.xlu0 %659
        %661 = vrot.lane.b32.xlu0 %v480, 112
        %v662 = vpop.permute.xlu0 %661
        %663 = vrot.lane.b32.xlu0 %v482, 112
        %v664 = vpop.permute.xlu0 %663
        %665 = vrot.lane.b32.xlu0 %v484, 112
        %v666 = vpop.permute.xlu0 %665
        %v667 = vsel %vm582, %v652, %v660
        %v668 = vsel %vm582, %v654, %v662
        %v669 = vsel %vm582, %v656, %v664
        %v670 = vsel %vm582, %v658, %v666
        %v671 = vsel %vm582, %v660, %v652
        %v672 = vsel %vm582, %v662, %v654
        %v673 = vsel %vm582, %v664, %v656
        %v674 = vsel %vm582, %v666, %v658
        %v675 = vsel %vm593, %v667, 0.0
        %v676 = vsel %vm594, %v671, 0.0
        %v677 = vsel %vm593, %v668, 0.0
        %v678 = vsel %vm594, %v672, 0.0
        %v679 = vsel %vm593, %v669, 0.0
        %v680 = vsel %vm594, %v673, 0.0
        %v681 = vsel %vm593, %v670, 0.0
        %v682 = vsel %vm594, %v674, 0.0
        %v683 = vpack.c.bf16 %v645, %v643
        %v684 = vpack.c.bf16 %v646, %v644
        %v685 = vpack.c.bf16 %v649, %v647
        %v686 = vpack.c.bf16 %v650, %v648
        %v687 = vpack.c.bf16 %v479, %v477
        %v688 = vpack.c.bf16 %v480, %v478
        %v689 = vpack.c.bf16 %v483, %v481
        %v690 = vpack.c.bf16 %v484, %v482
        %v691 = vpack.c.bf16 %v677, %v675
        %v692 = vpack.c.bf16 %v678, %v676
        %v693 = vpack.c.bf16 %v681, %v679
        %v694 = vpack.c.bf16 %v682, %v680
        %s695 = scalar_lea.vmem %s2, 16
        %v696 = vld [vmem:[%s695] sm:$0xf]
        %v697 = vld [vmem:[%s695 + $0x4] sm:$0xf]
        %v698 = vld [vmem:[%s695 + $0x8] sm:$0xf]
        %v699 = vld [vmem:[%s695 + $0xc] sm:$0xf]
        %v704 = vunpack.c.l.b16 %v696
        %v705 = vunpack.c.l.b16 %v697
        %v706 = vunpack.c.l.b16 %v698
        %v707 = vunpack.c.l.b16 %v699
        %v708 = vpack.c.b16 %v705, %v704
        %v709 = vpack.c.b16 %v707, %v706
        %vm710 = vcmask 785408
        %v712 = vsel %vm710, %v708, 0
        %v715 = vsel %vm710, %v709, 0
        %717 = vmatprep.subr.bf16.mxu0 0
        %718 = vmatpush1.bf16.msra.mxu0 0
        %719 = vmatprep.subr.bf16.mxu0 0
        %720 = vmatpush1.bf16.msra.mxu0 0
        %721 = vmatprep.subr.bf16.mxu0 %v694
        %722 = vmatpush1.bf16.msra.mxu0 %v693
        %723 = vmatprep.subr.bf16.mxu0 %v692
        %724 = vmatpush1.bf16.msra.mxu0 %v691
        %725 = vmatprep.subr.bf16.mxu0 %v690
        %726 = vmatpush1.bf16.msra.mxu0 %v689
        %727 = vmatprep.subr.bf16.mxu0 %v688
        %728 = vmatpush1.bf16.msra.mxu0 %v687
        %729 = vmatprep.subr.bf16.mxu0 %v686
        %730 = vmatpush1.bf16.msra.mxu0 %v685
        %731 = vmatprep.subr.bf16.mxu0 %v684
        %732 = vmatpush1.bf16.msra.mxu0 %v683
        %733 = vmatprep.subr.bf16.mxu0 0
        %734 = vmatpush2.bf16.msra.mxu0 0
        %735 = vmatprep.subr.bf16.mxu0 0
        %736 = vmatpush2.bf16.msra.mxu0 0
        %737 = vmatprep.subr.bf16.mxu0 0
        %738 = vmatpush2.bf16.msra.mxu0 0
        %739 = vmatprep.subr.bf16.mxu0 0
        %740 = vmatpush2.bf16.msra.mxu0 0
        %741 = vmatprep.subr.bf16.mxu0 0
        %742 = vmatpush2.bf16.msra.mxu0 0
        %743 = vmatprep.subr.bf16.mxu0 0
        %744 = vmatpush2.bf16.msra.mxu0 0
        %745 = vmatprep.subr.bf16.mxu0 0
        %746 = vmatpush2.bf16.msra.mxu0 0
        %747 = vmatprep.subr.bf16.mxu0 0
        %748 = vmatpush2.bf16.msra.mxu0 0
        %749 = vmatprep.mubr.bf16.mxu0 0
        %750 = vmatmul.mubr.bf16.gmra.mxu0 %v712
        %v751 = vpop.f32.mrf.mxu0
        %v752 = vadd.f32 0.0, %v751
        %v753 = vpop.f32.mrf.mxu0
        %v754 = vadd.f32 0.0, %v753
        %v755 = vpop.f32.mrf.mxu0
        %v756 = vadd.f32 0.0, %v755
        %v757 = vpop.f32.mrf.mxu0
        %v758 = vadd.f32 0.0, %v757
        %759 = vmatprep.mubr.bf16.mxu0 0
        %760 = vmatmul.mubr.bf16.gmra.mxu0 %v715
        %v761 = vpop.f32.mrf.mxu0
        %v762 = vadd.f32 0.0, %v761
        %v763 = vpop.f32.mrf.mxu0
        %v764 = vadd.f32 0.0, %v763
        %v765 = vpop.f32.mrf.mxu0
        %v766 = vadd.f32 0.0, %v765
        %v767 = vpop.f32.mrf.mxu0
        %v768 = vadd.f32 0.0, %v767
        %769 = vdwg.mxu0
        %v774 = vunpack.c.l.b16 %v615
        %v775 = vunpack.c.l.b16 %v616
        %v776 = vunpack.c.l.b16 %v617
        %v777 = vunpack.c.l.b16 %v618
        %v778 = vpack.c.b16 %v775, %v774
        %v779 = vpack.c.b16 %v777, %v776
        %v781 = vsel %vm710, %v778, 0
        %v784 = vsel %vm710, %v779, 0
        %786 = vmatprep.subr.bf16.mxu0 0
        %787 = vmatpush1.bf16.msra.mxu0 0
        %788 = vmatprep.subr.bf16.mxu0 0
        %789 = vmatpush1.bf16.msra.mxu0 0
        %790 = vmatprep.subr.bf16.mxu0 %v614
        %791 = vmatpush1.bf16.msra.mxu0 %v613
        %792 = vmatprep.subr.bf16.mxu0 %v612
        %793 = vmatpush1.bf16.msra.mxu0 %v611
        %794 = vmatprep.subr.bf16.mxu0 %v610
        %795 = vmatpush1.bf16.msra.mxu0 %v609
        %796 = vmatprep.subr.bf16.mxu0 %v608
        %797 = vmatpush1.bf16.msra.mxu0 %v607
        %798 = vmatprep.subr.bf16.mxu0 %v606
        %799 = vmatpush1.bf16.msra.mxu0 %v605
        %800 = vmatprep.subr.bf16.mxu0 %v604
        %801 = vmatpush1.bf16.msra.mxu0 %v603
        %802 = vmatprep.subr.bf16.mxu0 0
        %803 = vmatpush2.bf16.msra.mxu0 0
        %804 = vmatprep.subr.bf16.mxu0 0
        %805 = vmatpush2.bf16.msra.mxu0 0
        %806 = vmatprep.subr.bf16.mxu0 0
        %807 = vmatpush2.bf16.msra.mxu0 0
        %808 = vmatprep.subr.bf16.mxu0 0
        %809 = vmatpush2.bf16.msra.mxu0 0
        %810 = vmatprep.subr.bf16.mxu0 0
        %811 = vmatpush2.bf16.msra.mxu0 0
        %812 = vmatprep.subr.bf16.mxu0 0
        %813 = vmatpush2.bf16.msra.mxu0 0
        %814 = vmatprep.subr.bf16.mxu0 0
        %815 = vmatpush2.bf16.msra.mxu0 0
        %816 = vmatprep.subr.bf16.mxu0 0
        %817 = vmatpush2.bf16.msra.mxu0 0
        %818 = vmatprep.mubr.bf16.mxu0 0
        %819 = vmatmul.mubr.bf16.gmra.mxu0 %v781
        %v820 = vpop.f32.mrf.mxu0
        %v821 = vadd.f32 %v752, %v820
        %v822 = vpop.f32.mrf.mxu0
        %v823 = vadd.f32 %v754, %v822
        %v824 = vpop.f32.mrf.mxu0
        %v825 = vadd.f32 %v756, %v824
        %v826 = vpop.f32.mrf.mxu0
        %v827 = vadd.f32 %v758, %v826
        %828 = vmatprep.mubr.bf16.mxu0 0
        %829 = vmatmul.mubr.bf16.gmra.mxu0 %v784
        %v830 = vpop.f32.mrf.mxu0
        %v831 = vadd.f32 %v762, %v830
        %v832 = vpop.f32.mrf.mxu0
        %v833 = vadd.f32 %v764, %v832
        %v834 = vpop.f32.mrf.mxu0
        %v835 = vadd.f32 %v766, %v834
        %v836 = vpop.f32.mrf.mxu0
        %v837 = vadd.f32 %v768, %v836
        %838 = vdwg.mxu0
        %839 = vrot.lane.b32.xlu0 %v477, 127
        %v840 = vpop.permute.xlu0 %839
        %841 = vrot.lane.b32.xlu0 %v479, 127
        %v842 = vpop.permute.xlu0 %841
        %843 = vrot.lane.b32.xlu0 %v481, 127
        %v844 = vpop.permute.xlu0 %843
        %845 = vrot.lane.b32.xlu0 %v483, 127
        %v846 = vpop.permute.xlu0 %845
        %847 = vrot.lane.b32.xlu0 %v478, 127
        %v848 = vpop.permute.xlu0 %847
        %849 = vrot.lane.b32.xlu0 %v480, 127
        %v850 = vpop.permute.xlu0 %849
        %851 = vrot.lane.b32.xlu0 %v482, 127
        %v852 = vpop.permute.xlu0 %851
        %853 = vrot.lane.b32.xlu0 %v484, 127
        %v854 = vpop.permute.xlu0 %853
        %vm855 = vcmp.lt.s32.totalorder %v469, 127
        %v856 = vsel %vm855, %v840, %v848
        %v857 = vsel %vm855, %v842, %v850
        %v858 = vsel %vm855, %v844, %v852
        %v859 = vsel %vm855, %v846, %v854
        %v860 = vsel %vm855, %v848, %v840
        %v861 = vsel %vm855, %v850, %v842
        %v862 = vsel %vm855, %v852, %v844
        %v863 = vsel %vm855, %v854, %v846
        %v864 = vsel %vm472, 1, 0
        %v865 = vlaneseq
        %v866 = vshrl.u32 %v865, 7
        %v867 = vsub.s32 0, %v866
        %v868 = vrot.slane %v864, %v867
        %v869 = vlaneseq
        %v870 = vshrl.u32 %v869, 7
        %v871 = vsub.s32 1, %v870
        %v872 = vrot.slane %v864, %v871
        %vm873 = vcmp.eq.s32.totalorder %v868, 1
        %vm874 = vcmp.eq.s32.totalorder %v872, 1
        %v875 = vsel %vm873, %v856, 0.0
        %v876 = vsel %vm874, %v860, 0.0
        %v877 = vsel %vm873, %v857, 0.0
        %v878 = vsel %vm874, %v861, 0.0
        %v879 = vsel %vm873, %v858, 0.0
        %v880 = vsel %vm874, %v862, 0.0
        %v881 = vsel %vm873, %v859, 0.0
        %v882 = vsel %vm874, %v863, 0.0
        %883 = vrot.lane.b32.xlu0 %v875, 16
        %v884 = vpop.permute.xlu0 %883
        %885 = vrot.lane.b32.xlu0 %v877, 16
        %v886 = vpop.permute.xlu0 %885
        %887 = vrot.lane.b32.xlu0 %v879, 16
        %v888 = vpop.permute.xlu0 %887
        %889 = vrot.lane.b32.xlu0 %v881, 16
        %v890 = vpop.permute.xlu0 %889
        %891 = vrot.lane.b32.xlu0 %v876, 16
        %v892 = vpop.permute.xlu0 %891
        %893 = vrot.lane.b32.xlu0 %v878, 16
        %v894 = vpop.permute.xlu0 %893
        %895 = vrot.lane.b32.xlu0 %v880, 16
        %v896 = vpop.permute.xlu0 %895
        %897 = vrot.lane.b32.xlu0 %v882, 16
        %v898 = vpop.permute.xlu0 %897
        %v899 = vsel %vm545, %v884, %v892
        %v900 = vsel %vm545, %v886, %v894
        %v901 = vsel %vm545, %v888, %v896
        %v902 = vsel %vm545, %v890, %v898
        %v903 = vsel %vm545, %v892, %v884
        %v904 = vsel %vm545, %v894, %v886
        %v905 = vsel %vm545, %v896, %v888
        %v906 = vsel %vm545, %v898, %v890
        %v907 = vsel %vm556, %v903, 0.0
        %v908 = vsel %vm557, %v899, 0.0
        %v909 = vsel %vm556, %v904, 0.0
        %v910 = vsel %vm557, %v900, 0.0
        %v911 = vsel %vm556, %v905, 0.0
        %v912 = vsel %vm557, %v901, 0.0
        %v913 = vsel %vm556, %v906, 0.0
        %v914 = vsel %vm557, %v902, 0.0
        %915 = vrot.lane.b32.xlu0 %v875, 112
        %v916 = vpop.permute.xlu0 %915
        %917 = vrot.lane.b32.xlu0 %v877, 112
        %v918 = vpop.permute.xlu0 %917
        %919 = vrot.lane.b32.xlu0 %v879, 112
        %v920 = vpop.permute.xlu0 %919
        %921 = vrot.lane.b32.xlu0 %v881, 112
        %v922 = vpop.permute.xlu0 %921
        %923 = vrot.lane.b32.xlu0 %v876, 112
        %v924 = vpop.permute.xlu0 %923
        %925 = vrot.lane.b32.xlu0 %v878, 112
        %v926 = vpop.permute.xlu0 %925
        %927 = vrot.lane.b32.xlu0 %v880, 112
        %v928 = vpop.permute.xlu0 %927
        %929 = vrot.lane.b32.xlu0 %v882, 112
        %v930 = vpop.permute.xlu0 %929
        %v931 = vsel %vm582, %v916, %v924
        %v932 = vsel %vm582, %v918, %v926
        %v933 = vsel %vm582, %v920, %v928
        %v934 = vsel %vm582, %v922, %v930
        %v935 = vsel %vm582, %v924, %v916
        %v936 = vsel %vm582, %v926, %v918
        %v937 = vsel %vm582, %v928, %v920
        %v938 = vsel %vm582, %v930, %v922
        %v939 = vsel %vm593, %v931, 0.0
        %v940 = vsel %vm594, %v935, 0.0
        %v941 = vsel %vm593, %v932, 0.0
        %v942 = vsel %vm594, %v936, 0.0
        %v943 = vsel %vm593, %v933, 0.0
        %v944 = vsel %vm594, %v937, 0.0
        %v945 = vsel %vm593, %v934, 0.0
        %v946 = vsel %vm594, %v938, 0.0
        %v947 = vpack.c.bf16 %v909, %v907
        %v948 = vpack.c.bf16 %v910, %v908
        %v949 = vpack.c.bf16 %v913, %v911
        %v950 = vpack.c.bf16 %v914, %v912
        %v951 = vpack.c.bf16 %v877, %v875
        %v952 = vpack.c.bf16 %v878, %v876
        %v953 = vpack.c.bf16 %v881, %v879
        %v954 = vpack.c.bf16 %v882, %v880
        %v955 = vpack.c.bf16 %v941, %v939
        %v956 = vpack.c.bf16 %v942, %v940
        %v957 = vpack.c.bf16 %v945, %v943
        %v958 = vpack.c.bf16 %v946, %v944
        %s959 = scalar_lea.vmem %s2, 32
        %v960 = vld [vmem:[%s959] sm:$0xf]
        %v961 = vld [vmem:[%s959 + $0x4] sm:$0xf]
        %v962 = vld [vmem:[%s959 + $0x8] sm:$0xf]
        %v963 = vld [vmem:[%s959 + $0xc] sm:$0xf]
        %v968 = vunpack.c.l.b16 %v960
        %v969 = vunpack.c.l.b16 %v961
        %v970 = vunpack.c.l.b16 %v962
        %v971 = vunpack.c.l.b16 %v963
        %v972 = vpack.c.b16 %v969, %v968
        %v973 = vpack.c.b16 %v971, %v970
        %v975 = vsel %vm710, %v972, 0
        %v978 = vsel %vm710, %v973, 0
        %980 = vmatprep.subr.bf16.mxu0 0
        %981 = vmatpush1.bf16.msra.mxu0 0
        %982 = vmatprep.subr.bf16.mxu0 0
        %983 = vmatpush1.bf16.msra.mxu0 0
        %984 = vmatprep.subr.bf16.mxu0 %v958
        %985 = vmatpush1.bf16.msra.mxu0 %v957
        %986 = vmatprep.subr.bf16.mxu0 %v956
        %987 = vmatpush1.bf16.msra.mxu0 %v955
        %988 = vmatprep.subr.bf16.mxu0 %v954
        %989 = vmatpush1.bf16.msra.mxu0 %v953
        %990 = vmatprep.subr.bf16.mxu0 %v952
        %991 = vmatpush1.bf16.msra.mxu0 %v951
        %992 = vmatprep.subr.bf16.mxu0 %v950
        %993 = vmatpush1.bf16.msra.mxu0 %v949
        %994 = vmatprep.subr.bf16.mxu0 %v948
        %995 = vmatpush1.bf16.msra.mxu0 %v947
        %996 = vmatprep.subr.bf16.mxu0 0
        %997 = vmatpush2.bf16.msra.mxu0 0
        %998 = vmatprep.subr.bf16.mxu0 0
        %999 = vmatpush2.bf16.msra.mxu0 0
        %1000 = vmatprep.subr.bf16.mxu0 0
        %1001 = vmatpush2.bf16.msra.mxu0 0
        %1002 = vmatprep.subr.bf16.mxu0 0
        %1003 = vmatpush2.bf16.msra.mxu0 0
        %1004 = vmatprep.subr.bf16.mxu0 0
        %1005 = vmatpush2.bf16.msra.mxu0 0
        %1006 = vmatprep.subr.bf16.mxu0 0
        %1007 = vmatpush2.bf16.msra.mxu0 0
        %1008 = vmatprep.subr.bf16.mxu0 0
        %1009 = vmatpush2.bf16.msra.mxu0 0
        %1010 = vmatprep.subr.bf16.mxu0 0
        %1011 = vmatpush2.bf16.msra.mxu0 0
        %1012 = vmatprep.mubr.bf16.mxu0 0
        %1013 = vmatmul.mubr.bf16.gmra.mxu0 %v975
        %v1014 = vpop.f32.mrf.mxu0
        %v1015 = vadd.f32 0.0, %v1014
        %v1016 = vpop.f32.mrf.mxu0
        %v1017 = vadd.f32 0.0, %v1016
        %v1018 = vpop.f32.mrf.mxu0
        %v1019 = vadd.f32 0.0, %v1018
        %v1020 = vpop.f32.mrf.mxu0
        %v1021 = vadd.f32 0.0, %v1020
        %1022 = vmatprep.mubr.bf16.mxu0 0
        %1023 = vmatmul.mubr.bf16.gmra.mxu0 %v978
        %v1024 = vpop.f32.mrf.mxu0
        %v1025 = vadd.f32 0.0, %v1024
        %v1026 = vpop.f32.mrf.mxu0
        %v1027 = vadd.f32 0.0, %v1026
        %v1028 = vpop.f32.mrf.mxu0
        %v1029 = vadd.f32 0.0, %v1028
        %v1030 = vpop.f32.mrf.mxu0
        %v1031 = vadd.f32 0.0, %v1030
        %1032 = vdwg.mxu0
        %v1033 = vadd.f32 %v821, %v1015
        %v1034 = vadd.f32 %v823, %v1017
        %v1035 = vadd.f32 %v825, %v1019
        %v1036 = vadd.f32 %v827, %v1021
        %v1037 = vadd.f32 %v831, %v1025
        %v1038 = vadd.f32 %v833, %v1027
        %v1039 = vadd.f32 %v835, %v1029
        %v1040 = vadd.f32 %v837, %v1031
        %v1041 = vld [vmem:[%s3] sm:$0xff]
        %v1042 = vld [vmem:[%s3 + $0x8] sm:$0xff]
        %v1043 = vld [vmem:[%s3 + $0x10] sm:$0xff]
        %v1044 = vld [vmem:[%s3 + $0x18] sm:$0xff]
        %1046 = vset.pattern.permute.xlu0 0
        %1047 = vperm.xlu0 %1046, %v1041
        %v1048 = vpop.permute.xlu0 %1047
        %1051 = vset.pattern.permute.xlu0 0
        %1052 = vperm.xlu0 %1051, %v1042
        %v1053 = vpop.permute.xlu0 %1052
        %1056 = vset.pattern.permute.xlu0 0
        %1057 = vperm.xlu0 %1056, %v1043
        %v1058 = vpop.permute.xlu0 %1057
        %1061 = vset.pattern.permute.xlu0 0
        %1062 = vperm.xlu0 %1061, %v1044
        %v1063 = vpop.permute.xlu0 %1062
        %v1065 = vadd.f32 %v1033, %v1048
        %v1066 = vadd.f32 %v1034, %v1048
        %v1067 = vadd.f32 %v1035, %v1053
        %v1068 = vadd.f32 %v1036, %v1053
        %v1069 = vadd.f32 %v1037, %v1058
        %v1070 = vadd.f32 %v1038, %v1058
        %v1071 = vadd.f32 %v1039, %v1063
        %v1072 = vadd.f32 %v1040, %v1063
        %v1073 = vld [vmem:[%s4] sm:$0xff]
        %v1074 = vld [vmem:[%s4 + $0x8] sm:$0xff]
        %v1075 = vld [vmem:[%s4 + $0x10] sm:$0xff]
        %v1076 = vld [vmem:[%s4 + $0x18] sm:$0xff]
        %1078 = vset.pattern.permute.xlu0 0
        %1079 = vperm.xlu0 %1078, %v1073
        %v1080 = vpop.permute.xlu0 %1079
        %1083 = vset.pattern.permute.xlu0 0
        %1084 = vperm.xlu0 %1083, %v1074
        %v1085 = vpop.permute.xlu0 %1084
        %1088 = vset.pattern.permute.xlu0 0
        %1089 = vperm.xlu0 %1088, %v1075
        %v1090 = vpop.permute.xlu0 %1089
        %1093 = vset.pattern.permute.xlu0 0
        %1094 = vperm.xlu0 %1093, %v1076
        %v1095 = vpop.permute.xlu0 %1094
        %v1097 = vmul.f32 %v1065, %v1080
        %v1098 = vmul.f32 %v1066, %v1080
        %v1099 = vmul.f32 %v1067, %v1085
        %v1100 = vmul.f32 %v1068, %v1085
        %v1101 = vmul.f32 %v1069, %v1090
        %v1102 = vmul.f32 %v1070, %v1090
        %v1103 = vmul.f32 %v1071, %v1095
        %v1104 = vmul.f32 %v1072, %v1095
        %v1105 = vld [vmem:[%s5] sm:$0xff]
        %v1106 = vld [vmem:[%s5 + $0x8] sm:$0xff]
        %v1107 = vld [vmem:[%s5 + $0x10] sm:$0xff]
        %v1108 = vld [vmem:[%s5 + $0x18] sm:$0xff]
        %1110 = vset.pattern.permute.xlu0 0
        %1111 = vperm.xlu0 %1110, %v1105
        %v1112 = vpop.permute.xlu0 %1111
        %1115 = vset.pattern.permute.xlu0 0
        %1116 = vperm.xlu0 %1115, %v1106
        %v1117 = vpop.permute.xlu0 %1116
        %1120 = vset.pattern.permute.xlu0 0
        %1121 = vperm.xlu0 %1120, %v1107
        %v1122 = vpop.permute.xlu0 %1121
        %1125 = vset.pattern.permute.xlu0 0
        %1126 = vperm.xlu0 %1125, %v1108
        %v1127 = vpop.permute.xlu0 %1126
        %v1129 = vadd.f32 %v1097, %v1112
        %v1130 = vadd.f32 %v1098, %v1112
        %v1131 = vadd.f32 %v1099, %v1117
        %v1132 = vadd.f32 %v1100, %v1117
        %v1133 = vadd.f32 %v1101, %v1122
        %v1134 = vadd.f32 %v1102, %v1122
        %v1135 = vadd.f32 %v1103, %v1127
        %v1136 = vadd.f32 %v1104, %v1127
        %v1137 = vmax.f32 %v1129, 0.0
        %v1138 = vmax.f32 %v1130, 0.0
        %v1139 = vmax.f32 %v1131, 0.0
        %v1140 = vmax.f32 %v1132, 0.0
        %v1141 = vmax.f32 %v1133, 0.0
        %v1142 = vmax.f32 %v1134, 0.0
        %v1143 = vmax.f32 %v1135, 0.0
        %v1144 = vmax.f32 %v1136, 0.0
        %1145 = vrot.lane.b32.xlu0 %v1137, 1
        %v1146 = vpop.permute.xlu0 %1145
        %1147 = vrot.lane.b32.xlu0 %v1139, 1
        %v1148 = vpop.permute.xlu0 %1147
        %1149 = vrot.lane.b32.xlu0 %v1141, 1
        %v1150 = vpop.permute.xlu0 %1149
        %1151 = vrot.lane.b32.xlu0 %v1143, 1
        %v1152 = vpop.permute.xlu0 %1151
        %1153 = vrot.lane.b32.xlu0 %v1138, 1
        %v1154 = vpop.permute.xlu0 %1153
        %1155 = vrot.lane.b32.xlu0 %v1140, 1
        %v1156 = vpop.permute.xlu0 %1155
        %1157 = vrot.lane.b32.xlu0 %v1142, 1
        %v1158 = vpop.permute.xlu0 %1157
        %1159 = vrot.lane.b32.xlu0 %v1144, 1
        %v1160 = vpop.permute.xlu0 %1159
        %v1161 = vsel %vm501, %v1146, %v1154
        %v1162 = vsel %vm501, %v1148, %v1156
        %v1163 = vsel %vm501, %v1150, %v1158
        %v1164 = vsel %vm501, %v1152, %v1160
        %v1165 = vsel %vm501, %v1154, %v1146
        %v1166 = vsel %vm501, %v1156, %v1148
        %v1167 = vsel %vm501, %v1158, %v1150
        %v1168 = vsel %vm501, %v1160, %v1152
        %v1169 = vsel %vm519, %v1165, 0.0
        %v1170 = vsel %vm520, %v1161, 0.0
        %v1171 = vsel %vm519, %v1166, 0.0
        %v1172 = vsel %vm520, %v1162, 0.0
        %v1173 = vsel %vm519, %v1167, 0.0
        %v1174 = vsel %vm520, %v1163, 0.0
        %v1175 = vsel %vm519, %v1168, 0.0
        %v1176 = vsel %vm520, %v1164, 0.0
        %1177 = vrot.lane.b32.xlu0 %v1169, 16
        %v1178 = vpop.permute.xlu0 %1177
        %1179 = vrot.lane.b32.xlu0 %v1171, 16
        %v1180 = vpop.permute.xlu0 %1179
        %1181 = vrot.lane.b32.xlu0 %v1173, 16
        %v1182 = vpop.permute.xlu0 %1181
        %1183 = vrot.lane.b32.xlu0 %v1175, 16
        %v1184 = vpop.permute.xlu0 %1183
        %1185 = vrot.lane.b32.xlu0 %v1170, 16
        %v1186 = vpop.permute.xlu0 %1185
        %1187 = vrot.lane.b32.xlu0 %v1172, 16
        %v1188 = vpop.permute.xlu0 %1187
        %1189 = vrot.lane.b32.xlu0 %v1174, 16
        %v1190 = vpop.permute.xlu0 %1189
        %1191 = vrot.lane.b32.xlu0 %v1176, 16
        %v1192 = vpop.permute.xlu0 %1191
        %v1193 = vsel %vm545, %v1178, %v1186
        %v1194 = vsel %vm545, %v1180, %v1188
        %v1195 = vsel %vm545, %v1182, %v1190
        %v1196 = vsel %vm545, %v1184, %v1192
        %v1197 = vsel %vm545, %v1186, %v1178
        %v1198 = vsel %vm545, %v1188, %v1180
        %v1199 = vsel %vm545, %v1190, %v1182
        %v1200 = vsel %vm545, %v1192, %v1184
        %v1201 = vsel %vm556, %v1197, 0.0
        %v1202 = vsel %vm557, %v1193, 0.0
        %v1203 = vsel %vm556, %v1198, 0.0
        %v1204 = vsel %vm557, %v1194, 0.0
        %v1205 = vsel %vm556, %v1199, 0.0
        %v1206 = vsel %vm557, %v1195, 0.0
        %v1207 = vsel %vm556, %v1200, 0.0
        %v1208 = vsel %vm557, %v1196, 0.0
        %1209 = vrot.lane.b32.xlu0 %v1169, 112
        %v1210 = vpop.permute.xlu0 %1209
        %1211 = vrot.lane.b32.xlu0 %v1171, 112
        %v1212 = vpop.permute.xlu0 %1211
        %1213 = vrot.lane.b32.xlu0 %v1173, 112
        %v1214 = vpop.permute.xlu0 %1213
        %1215 = vrot.lane.b32.xlu0 %v1175, 112
        %v1216 = vpop.permute.xlu0 %1215
        %1217 = vrot.lane.b32.xlu0 %v1170, 112
        %v1218 = vpop.permute.xlu0 %1217
        %1219 = vrot.lane.b32.xlu0 %v1172, 112
        %v1220 = vpop.permute.xlu0 %1219
        %1221 = vrot.lane.b32.xlu0 %v1174, 112
        %v1222 = vpop.permute.xlu0 %1221
        %1223 = vrot.lane.b32.xlu0 %v1176, 112
        %v1224 = vpop.permute.xlu0 %1223
        %v1225 = vsel %vm582, %v1210, %v1218
        %v1226 = vsel %vm582, %v1212, %v1220
        %v1227 = vsel %vm582, %v1214, %v1222
        %v1228 = vsel %vm582, %v1216, %v1224
        %v1229 = vsel %vm582, %v1218, %v1210
        %v1230 = vsel %vm582, %v1220, %v1212
        %v1231 = vsel %vm582, %v1222, %v1214
        %v1232 = vsel %vm582, %v1224, %v1216
        %v1233 = vsel %vm593, %v1225, 0.0
        %v1234 = vsel %vm594, %v1229, 0.0
        %v1235 = vsel %vm593, %v1226, 0.0
        %v1236 = vsel %vm594, %v1230, 0.0
        %v1237 = vsel %vm593, %v1227, 0.0
        %v1238 = vsel %vm594, %v1231, 0.0
        %v1239 = vsel %vm593, %v1228, 0.0
        %v1240 = vsel %vm594, %v1232, 0.0
        %v1241 = vpack.c.bf16 %v1203, %v1201
        %v1242 = vpack.c.bf16 %v1204, %v1202
        %v1243 = vpack.c.bf16 %v1207, %v1205
        %v1244 = vpack.c.bf16 %v1208, %v1206
        %v1245 = vpack.c.bf16 %v1171, %v1169
        %v1246 = vpack.c.bf16 %v1172, %v1170
        %v1247 = vpack.c.bf16 %v1175, %v1173
        %v1248 = vpack.c.bf16 %v1176, %v1174
        %v1249 = vpack.c.bf16 %v1235, %v1233
        %v1250 = vpack.c.bf16 %v1236, %v1234
        %v1251 = vpack.c.bf16 %v1239, %v1237
        %v1252 = vpack.c.bf16 %v1240, %v1238
        %v1253 = vld [vmem:[%s6] sm:$0xf]
        %v1254 = vld [vmem:[%s6 + $0x4] sm:$0xf]
        %v1255 = vld [vmem:[%s6 + $0x8] sm:$0xf]
        %v1256 = vld [vmem:[%s6 + $0xc] sm:$0xf]
        %1257 = vrot.lane.b32.xlu0 %v1137, 16
        %v1258 = vpop.permute.xlu0 %1257
        %1259 = vrot.lane.b32.xlu0 %v1139, 16
        %v1260 = vpop.permute.xlu0 %1259
        %1261 = vrot.lane.b32.xlu0 %v1141, 16
        %v1262 = vpop.permute.xlu0 %1261
        %1263 = vrot.lane.b32.xlu0 %v1143, 16
        %v1264 = vpop.permute.xlu0 %1263
        %1265 = vrot.lane.b32.xlu0 %v1138, 16
        %v1266 = vpop.permute.xlu0 %1265
        %1267 = vrot.lane.b32.xlu0 %v1140, 16
        %v1268 = vpop.permute.xlu0 %1267
        %1269 = vrot.lane.b32.xlu0 %v1142, 16
        %v1270 = vpop.permute.xlu0 %1269
        %1271 = vrot.lane.b32.xlu0 %v1144, 16
        %v1272 = vpop.permute.xlu0 %1271
        %v1273 = vsel %vm545, %v1258, %v1266
        %v1274 = vsel %vm545, %v1260, %v1268
        %v1275 = vsel %vm545, %v1262, %v1270
        %v1276 = vsel %vm545, %v1264, %v1272
        %v1277 = vsel %vm545, %v1266, %v1258
        %v1278 = vsel %vm545, %v1268, %v1260
        %v1279 = vsel %vm545, %v1270, %v1262
        %v1280 = vsel %vm545, %v1272, %v1264
        %v1281 = vsel %vm556, %v1277, 0.0
        %v1282 = vsel %vm557, %v1273, 0.0
        %v1283 = vsel %vm556, %v1278, 0.0
        %v1284 = vsel %vm557, %v1274, 0.0
        %v1285 = vsel %vm556, %v1279, 0.0
        %v1286 = vsel %vm557, %v1275, 0.0
        %v1287 = vsel %vm556, %v1280, 0.0
        %v1288 = vsel %vm557, %v1276, 0.0
        %1289 = vrot.lane.b32.xlu0 %v1137, 112
        %v1290 = vpop.permute.xlu0 %1289
        %1291 = vrot.lane.b32.xlu0 %v1139, 112
        %v1292 = vpop.permute.xlu0 %1291
        %1293 = vrot.lane.b32.xlu0 %v1141, 112
        %v1294 = vpop.permute.xlu0 %1293
        %1295 = vrot.lane.b32.xlu0 %v1143, 112
        %v1296 = vpop.permute.xlu0 %1295
        %1297 = vrot.lane.b32.xlu0 %v1138, 112
        %v1298 = vpop.permute.xlu0 %1297
        %1299 = vrot.lane.b32.xlu0 %v1140, 112
        %v1300 = vpop.permute.xlu0 %1299
        %1301 = vrot.lane.b32.xlu0 %v1142, 112
        %v1302 = vpop.permute.xlu0 %1301
        %1303 = vrot.lane.b32.xlu0 %v1144, 112
        %v1304 = vpop.permute.xlu0 %1303
        %v1305 = vsel %vm582, %v1290, %v1298
        %v1306 = vsel %vm582, %v1292, %v1300
        %v1307 = vsel %vm582, %v1294, %v1302
        %v1308 = vsel %vm582, %v1296, %v1304
        %v1309 = vsel %vm582, %v1298, %v1290
        %v1310 = vsel %vm582, %v1300, %v1292
        %v1311 = vsel %vm582, %v1302, %v1294
        %v1312 = vsel %vm582, %v1304, %v1296
        %v1313 = vsel %vm593, %v1305, 0.0
        %v1314 = vsel %vm594, %v1309, 0.0
        %v1315 = vsel %vm593, %v1306, 0.0
        %v1316 = vsel %vm594, %v1310, 0.0
        %v1317 = vsel %vm593, %v1307, 0.0
        %v1318 = vsel %vm594, %v1311, 0.0
        %v1319 = vsel %vm593, %v1308, 0.0
        %v1320 = vsel %vm594, %v1312, 0.0
        %v1321 = vpack.c.bf16 %v1283, %v1281
        %v1322 = vpack.c.bf16 %v1284, %v1282
        %v1323 = vpack.c.bf16 %v1287, %v1285
        %v1324 = vpack.c.bf16 %v1288, %v1286
        %v1325 = vpack.c.bf16 %v1139, %v1137
        %v1326 = vpack.c.bf16 %v1140, %v1138
        %v1327 = vpack.c.bf16 %v1143, %v1141
        %v1328 = vpack.c.bf16 %v1144, %v1142
        %v1329 = vpack.c.bf16 %v1315, %v1313
        %v1330 = vpack.c.bf16 %v1316, %v1314
        %v1331 = vpack.c.bf16 %v1319, %v1317
        %v1332 = vpack.c.bf16 %v1320, %v1318
        %s1333 = scalar_lea.vmem %s6, 16
        %v1334 = vld [vmem:[%s1333] sm:$0xf]
        %v1335 = vld [vmem:[%s1333 + $0x4] sm:$0xf]
        %v1336 = vld [vmem:[%s1333 + $0x8] sm:$0xf]
        %v1337 = vld [vmem:[%s1333 + $0xc] sm:$0xf]
        %v1342 = vunpack.c.l.b16 %v1334
        %v1343 = vunpack.c.l.b16 %v1335
        %v1344 = vunpack.c.l.b16 %v1336
        %v1345 = vunpack.c.l.b16 %v1337
        %v1346 = vpack.c.b16 %v1343, %v1342
        %v1347 = vpack.c.b16 %v1345, %v1344
        %v1349 = vsel %vm710, %v1346, 0
        %v1352 = vsel %vm710, %v1347, 0
        %1354 = vmatprep.subr.bf16.mxu0 0
        %1355 = vmatpush1.bf16.msra.mxu0 0
        %1356 = vmatprep.subr.bf16.mxu0 0
        %1357 = vmatpush1.bf16.msra.mxu0 0
        %1358 = vmatprep.subr.bf16.mxu0 %v1332
        %1359 = vmatpush1.bf16.msra.mxu0 %v1331
        %1360 = vmatprep.subr.bf16.mxu0 %v1330
        %1361 = vmatpush1.bf16.msra.mxu0 %v1329
        %1362 = vmatprep.subr.bf16.mxu0 %v1328
        %1363 = vmatpush1.bf16.msra.mxu0 %v1327
        %1364 = vmatprep.subr.bf16.mxu0 %v1326
        %1365 = vmatpush1.bf16.msra.mxu0 %v1325
        %1366 = vmatprep.subr.bf16.mxu0 %v1324
        %1367 = vmatpush1.bf16.msra.mxu0 %v1323
        %1368 = vmatprep.subr.bf16.mxu0 %v1322
        %1369 = vmatpush1.bf16.msra.mxu0 %v1321
        %1370 = vmatprep.subr.bf16.mxu0 0
        %1371 = vmatpush2.bf16.msra.mxu0 0
        %1372 = vmatprep.subr.bf16.mxu0 0
        %1373 = vmatpush2.bf16.msra.mxu0 0
        %1374 = vmatprep.subr.bf16.mxu0 0
        %1375 = vmatpush2.bf16.msra.mxu0 0
        %1376 = vmatprep.subr.bf16.mxu0 0
        %1377 = vmatpush2.bf16.msra.mxu0 0
        %1378 = vmatprep.subr.bf16.mxu0 0
        %1379 = vmatpush2.bf16.msra.mxu0 0
        %1380 = vmatprep.subr.bf16.mxu0 0
        %1381 = vmatpush2.bf16.msra.mxu0 0
        %1382 = vmatprep.subr.bf16.mxu0 0
        %1383 = vmatpush2.bf16.msra.mxu0 0
        %1384 = vmatprep.subr.bf16.mxu0 0
        %1385 = vmatpush2.bf16.msra.mxu0 0
        %1386 = vmatprep.mubr.bf16.mxu0 0
        %1387 = vmatmul.mubr.bf16.gmra.mxu0 %v1349
        %v1388 = vpop.f32.mrf.mxu0
        %v1389 = vadd.f32 0.0, %v1388
        %v1390 = vpop.f32.mrf.mxu0
        %v1391 = vadd.f32 0.0, %v1390
        %v1392 = vpop.f32.mrf.mxu0
        %v1393 = vadd.f32 0.0, %v1392
        %v1394 = vpop.f32.mrf.mxu0
        %v1395 = vadd.f32 0.0, %v1394
        %1396 = vmatprep.mubr.bf16.mxu0 0
        %1397 = vmatmul.mubr.bf16.gmra.mxu0 %v1352
        %v1398 = vpop.f32.mrf.mxu0
        %v1399 = vadd.f32 0.0, %v1398
        %v1400 = vpop.f32.mrf.mxu0
        %v1401 = vadd.f32 0.0, %v1400
        %v1402 = vpop.f32.mrf.mxu0
        %v1403 = vadd.f32 0.0, %v1402
        %v1404 = vpop.f32.mrf.mxu0
        %v1405 = vadd.f32 0.0, %v1404
        %1406 = vdwg.mxu0
        %v1411 = vunpack.c.l.b16 %v1253
        %v1412 = vunpack.c.l.b16 %v1254
        %v1413 = vunpack.c.l.b16 %v1255
        %v1414 = vunpack.c.l.b16 %v1256
        %v1415 = vpack.c.b16 %v1412, %v1411
        %v1416 = vpack.c.b16 %v1414, %v1413
        %v1418 = vsel %vm710, %v1415, 0
        %v1421 = vsel %vm710, %v1416, 0
        %1423 = vmatprep.subr.bf16.mxu0 0
        %1424 = vmatpush1.bf16.msra.mxu0 0
        %1425 = vmatprep.subr.bf16.mxu0 0
        %1426 = vmatpush1.bf16.msra.mxu0 0
        %1427 = vmatprep.subr.bf16.mxu0 %v1252
        %1428 = vmatpush1.bf16.msra.mxu0 %v1251
        %1429 = vmatprep.subr.bf16.mxu0 %v1250
        %1430 = vmatpush1.bf16.msra.mxu0 %v1249
        %1431 = vmatprep.subr.bf16.mxu0 %v1248
        %1432 = vmatpush1.bf16.msra.mxu0 %v1247
        %1433 = vmatprep.subr.bf16.mxu0 %v1246
        %1434 = vmatpush1.bf16.msra.mxu0 %v1245
        %1435 = vmatprep.subr.bf16.mxu0 %v1244
        %1436 = vmatpush1.bf16.msra.mxu0 %v1243
        %1437 = vmatprep.subr.bf16.mxu0 %v1242
        %1438 = vmatpush1.bf16.msra.mxu0 %v1241
        %1439 = vmatprep.subr.bf16.mxu0 0
        %1440 = vmatpush2.bf16.msra.mxu0 0
        %1441 = vmatprep.subr.bf16.mxu0 0
        %1442 = vmatpush2.bf16.msra.mxu0 0
        %1443 = vmatprep.subr.bf16.mxu0 0
        %1444 = vmatpush2.bf16.msra.mxu0 0
        %1445 = vmatprep.subr.bf16.mxu0 0
        %1446 = vmatpush2.bf16.msra.mxu0 0
        %1447 = vmatprep.subr.bf16.mxu0 0
        %1448 = vmatpush2.bf16.msra.mxu0 0
        %1449 = vmatprep.subr.bf16.mxu0 0
        %1450 = vmatpush2.bf16.msra.mxu0 0
        %1451 = vmatprep.subr.bf16.mxu0 0
        %1452 = vmatpush2.bf16.msra.mxu0 0
        %1453 = vmatprep.subr.bf16.mxu0 0
        %1454 = vmatpush2.bf16.msra.mxu0 0
        %1455 = vmatprep.mubr.bf16.mxu0 0
        %1456 = vmatmul.mubr.bf16.gmra.mxu0 %v1418
        %v1457 = vpop.f32.mrf.mxu0
        %v1458 = vadd.f32 %v1389, %v1457
        %v1459 = vpop.f32.mrf.mxu0
        %v1460 = vadd.f32 %v1391, %v1459
        %v1461 = vpop.f32.mrf.mxu0
        %v1462 = vadd.f32 %v1393, %v1461
        %v1463 = vpop.f32.mrf.mxu0
        %v1464 = vadd.f32 %v1395, %v1463
        %1465 = vmatprep.mubr.bf16.mxu0 0
        %1466 = vmatmul.mubr.bf16.gmra.mxu0 %v1421
        %v1467 = vpop.f32.mrf.mxu0
        %v1468 = vadd.f32 %v1399, %v1467
        %v1469 = vpop.f32.mrf.mxu0
        %v1470 = vadd.f32 %v1401, %v1469
        %v1471 = vpop.f32.mrf.mxu0
        %v1472 = vadd.f32 %v1403, %v1471
        %v1473 = vpop.f32.mrf.mxu0
        %v1474 = vadd.f32 %v1405, %v1473
        %1475 = vdwg.mxu0
        %1476 = vrot.lane.b32.xlu0 %v1137, 127
        %v1477 = vpop.permute.xlu0 %1476
        %1478 = vrot.lane.b32.xlu0 %v1139, 127
        %v1479 = vpop.permute.xlu0 %1478
        %1480 = vrot.lane.b32.xlu0 %v1141, 127
        %v1481 = vpop.permute.xlu0 %1480
        %1482 = vrot.lane.b32.xlu0 %v1143, 127
        %v1483 = vpop.permute.xlu0 %1482
        %1484 = vrot.lane.b32.xlu0 %v1138, 127
        %v1485 = vpop.permute.xlu0 %1484
        %1486 = vrot.lane.b32.xlu0 %v1140, 127
        %v1487 = vpop.permute.xlu0 %1486
        %1488 = vrot.lane.b32.xlu0 %v1142, 127
        %v1489 = vpop.permute.xlu0 %1488
        %1490 = vrot.lane.b32.xlu0 %v1144, 127
        %v1491 = vpop.permute.xlu0 %1490
        %v1492 = vsel %vm855, %v1477, %v1485
        %v1493 = vsel %vm855, %v1479, %v1487
        %v1494 = vsel %vm855, %v1481, %v1489
        %v1495 = vsel %vm855, %v1483, %v1491
        %v1496 = vsel %vm855, %v1485, %v1477
        %v1497 = vsel %vm855, %v1487, %v1479
        %v1498 = vsel %vm855, %v1489, %v1481
        %v1499 = vsel %vm855, %v1491, %v1483
        %v1500 = vsel %vm873, %v1492, 0.0
        %v1501 = vsel %vm874, %v1496, 0.0
        %v1502 = vsel %vm873, %v1493, 0.0
        %v1503 = vsel %vm874, %v1497, 0.0
        %v1504 = vsel %vm873, %v1494, 0.0
        %v1505 = vsel %vm874, %v1498, 0.0
        %v1506 = vsel %vm873, %v1495, 0.0
        %v1507 = vsel %vm874, %v1499, 0.0
        %1508 = vrot.lane.b32.xlu0 %v1500, 16
        %v1509 = vpop.permute.xlu0 %1508
        %1510 = vrot.lane.b32.xlu0 %v1502, 16
        %v1511 = vpop.permute.xlu0 %1510
        %1512 = vrot.lane.b32.xlu0 %v1504, 16
        %v1513 = vpop.permute.xlu0 %1512
        %1514 = vrot.lane.b32.xlu0 %v1506, 16
        %v1515 = vpop.permute.xlu0 %1514
        %1516 = vrot.lane.b32.xlu0 %v1501, 16
        %v1517 = vpop.permute.xlu0 %1516
        %1518 = vrot.lane.b32.xlu0 %v1503, 16
        %v1519 = vpop.permute.xlu0 %1518
        %1520 = vrot.lane.b32.xlu0 %v1505, 16
        %v1521 = vpop.permute.xlu0 %1520
        %1522 = vrot.lane.b32.xlu0 %v1507, 16
        %v1523 = vpop.permute.xlu0 %1522
        %v1524 = vsel %vm545, %v1509, %v1517
        %v1525 = vsel %vm545, %v1511, %v1519
        %v1526 = vsel %vm545, %v1513, %v1521
        %v1527 = vsel %vm545, %v1515, %v1523
        %v1528 = vsel %vm545, %v1517, %v1509
        %v1529 = vsel %vm545, %v1519, %v1511
        %v1530 = vsel %vm545, %v1521, %v1513
        %v1531 = vsel %vm545, %v1523, %v1515
        %v1532 = vsel %vm556, %v1528, 0.0
        %v1533 = vsel %vm557, %v1524, 0.0
        %v1534 = vsel %vm556, %v1529, 0.0
        %v1535 = vsel %vm557, %v1525, 0.0
        %v1536 = vsel %vm556, %v1530, 0.0
        %v1537 = vsel %vm557, %v1526, 0.0
        %v1538 = vsel %vm556, %v1531, 0.0
        %v1539 = vsel %vm557, %v1527, 0.0
        %1540 = vrot.lane.b32.xlu0 %v1500, 112
        %v1541 = vpop.permute.xlu0 %1540
        %1542 = vrot.lane.b32.xlu0 %v1502, 112
        %v1543 = vpop.permute.xlu0 %1542
        %1544 = vrot.lane.b32.xlu0 %v1504, 112
        %v1545 = vpop.permute.xlu0 %1544
        %1546 = vrot.lane.b32.xlu0 %v1506, 112
        %v1547 = vpop.permute.xlu0 %1546
        %1548 = vrot.lane.b32.xlu0 %v1501, 112
        %v1549 = vpop.permute.xlu0 %1548
        %1550 = vrot.lane.b32.xlu0 %v1503, 112
        %v1551 = vpop.permute.xlu0 %1550
        %1552 = vrot.lane.b32.xlu0 %v1505, 112
        %v1553 = vpop.permute.xlu0 %1552
        %1554 = vrot.lane.b32.xlu0 %v1507, 112
        %v1555 = vpop.permute.xlu0 %1554
        %v1556 = vsel %vm582, %v1541, %v1549
        %v1557 = vsel %vm582, %v1543, %v1551
        %v1558 = vsel %vm582, %v1545, %v1553
        %v1559 = vsel %vm582, %v1547, %v1555
        %v1560 = vsel %vm582, %v1549, %v1541
        %v1561 = vsel %vm582, %v1551, %v1543
        %v1562 = vsel %vm582, %v1553, %v1545
        %v1563 = vsel %vm582, %v1555, %v1547
        %v1564 = vsel %vm593, %v1556, 0.0
        %v1565 = vsel %vm594, %v1560, 0.0
        %v1566 = vsel %vm593, %v1557, 0.0
        %v1567 = vsel %vm594, %v1561, 0.0
        %v1568 = vsel %vm593, %v1558, 0.0
        %v1569 = vsel %vm594, %v1562, 0.0
        %v1570 = vsel %vm593, %v1559, 0.0
        %v1571 = vsel %vm594, %v1563, 0.0
        %v1572 = vpack.c.bf16 %v1534, %v1532
        %v1573 = vpack.c.bf16 %v1535, %v1533
        %v1574 = vpack.c.bf16 %v1538, %v1536
        %v1575 = vpack.c.bf16 %v1539, %v1537
        %v1576 = vpack.c.bf16 %v1502, %v1500
        %v1577 = vpack.c.bf16 %v1503, %v1501
        %v1578 = vpack.c.bf16 %v1506, %v1504
        %v1579 = vpack.c.bf16 %v1507, %v1505
        %v1580 = vpack.c.bf16 %v1566, %v1564
        %v1581 = vpack.c.bf16 %v1567, %v1565
        %v1582 = vpack.c.bf16 %v1570, %v1568
        %v1583 = vpack.c.bf16 %v1571, %v1569
        %s1584 = scalar_lea.vmem %s6, 32
        %v1585 = vld [vmem:[%s1584] sm:$0xf]
        %v1586 = vld [vmem:[%s1584 + $0x4] sm:$0xf]
        %v1587 = vld [vmem:[%s1584 + $0x8] sm:$0xf]
        %v1588 = vld [vmem:[%s1584 + $0xc] sm:$0xf]
        %v1593 = vunpack.c.l.b16 %v1585
        %v1594 = vunpack.c.l.b16 %v1586
        %v1595 = vunpack.c.l.b16 %v1587
        %v1596 = vunpack.c.l.b16 %v1588
        %v1597 = vpack.c.b16 %v1594, %v1593
        %v1598 = vpack.c.b16 %v1596, %v1595
        %v1600 = vsel %vm710, %v1597, 0
        %v1603 = vsel %vm710, %v1598, 0
        %1605 = vmatprep.subr.bf16.mxu0 0
        %1606 = vmatpush1.bf16.msra.mxu0 0
        %1607 = vmatprep.subr.bf16.mxu0 0
        %1608 = vmatpush1.bf16.msra.mxu0 0
        %1609 = vmatprep.subr.bf16.mxu0 %v1583
        %1610 = vmatpush1.bf16.msra.mxu0 %v1582
        %1611 = vmatprep.subr.bf16.mxu0 %v1581
        %1612 = vmatpush1.bf16.msra.mxu0 %v1580
        %1613 = vmatprep.subr.bf16.mxu0 %v1579
        %1614 = vmatpush1.bf16.msra.mxu0 %v1578
        %1615 = vmatprep.subr.bf16.mxu0 %v1577
        %1616 = vmatpush1.bf16.msra.mxu0 %v1576
        %1617 = vmatprep.subr.bf16.mxu0 %v1575
        %1618 = vmatpush1.bf16.msra.mxu0 %v1574
        %1619 = vmatprep.subr.bf16.mxu0 %v1573
        %1620 = vmatpush1.bf16.msra.mxu0 %v1572
        %1621 = vmatprep.subr.bf16.mxu0 0
        %1622 = vmatpush2.bf16.msra.mxu0 0
        %1623 = vmatprep.subr.bf16.mxu0 0
        %1624 = vmatpush2.bf16.msra.mxu0 0
        %1625 = vmatprep.subr.bf16.mxu0 0
        %1626 = vmatpush2.bf16.msra.mxu0 0
        %1627 = vmatprep.subr.bf16.mxu0 0
        %1628 = vmatpush2.bf16.msra.mxu0 0
        %1629 = vmatprep.subr.bf16.mxu0 0
        %1630 = vmatpush2.bf16.msra.mxu0 0
        %1631 = vmatprep.subr.bf16.mxu0 0
        %1632 = vmatpush2.bf16.msra.mxu0 0
        %1633 = vmatprep.subr.bf16.mxu0 0
        %1634 = vmatpush2.bf16.msra.mxu0 0
        %1635 = vmatprep.subr.bf16.mxu0 0
        %1636 = vmatpush2.bf16.msra.mxu0 0
        %1637 = vmatprep.mubr.bf16.mxu0 0
        %1638 = vmatmul.mubr.bf16.gmra.mxu0 %v1600
        %v1639 = vpop.f32.mrf.mxu0
        %v1640 = vadd.f32 0.0, %v1639
        %v1641 = vpop.f32.mrf.mxu0
        %v1642 = vadd.f32 0.0, %v1641
        %v1643 = vpop.f32.mrf.mxu0
        %v1644 = vadd.f32 0.0, %v1643
        %v1645 = vpop.f32.mrf.mxu0
        %v1646 = vadd.f32 0.0, %v1645
        %1647 = vmatprep.mubr.bf16.mxu0 0
        %1648 = vmatmul.mubr.bf16.gmra.mxu0 %v1603
        %v1649 = vpop.f32.mrf.mxu0
        %v1650 = vadd.f32 0.0, %v1649
        %v1651 = vpop.f32.mrf.mxu0
        %v1652 = vadd.f32 0.0, %v1651
        %v1653 = vpop.f32.mrf.mxu0
        %v1654 = vadd.f32 0.0, %v1653
        %v1655 = vpop.f32.mrf.mxu0
        %v1656 = vadd.f32 0.0, %v1655
        %1657 = vdwg.mxu0
        %v1658 = vadd.f32 %v1458, %v1640
        %v1659 = vadd.f32 %v1460, %v1642
        %v1660 = vadd.f32 %v1462, %v1644
        %v1661 = vadd.f32 %v1464, %v1646
        %v1662 = vadd.f32 %v1468, %v1650
        %v1663 = vadd.f32 %v1470, %v1652
        %v1664 = vadd.f32 %v1472, %v1654
        %v1665 = vadd.f32 %v1474, %v1656
        %v1666 = vld [vmem:[%s7] sm:$0xff]
        %v1667 = vld [vmem:[%s7 + $0x8] sm:$0xff]
        %v1668 = vld [vmem:[%s7 + $0x10] sm:$0xff]
        %v1669 = vld [vmem:[%s7 + $0x18] sm:$0xff]
        %1671 = vset.pattern.permute.xlu0 0
        %1672 = vperm.xlu0 %1671, %v1666
        %v1673 = vpop.permute.xlu0 %1672
        %1676 = vset.pattern.permute.xlu0 0
        %1677 = vperm.xlu0 %1676, %v1667
        %v1678 = vpop.permute.xlu0 %1677
        %1681 = vset.pattern.permute.xlu0 0
        %1682 = vperm.xlu0 %1681, %v1668
        %v1683 = vpop.permute.xlu0 %1682
        %1686 = vset.pattern.permute.xlu0 0
        %1687 = vperm.xlu0 %1686, %v1669
        %v1688 = vpop.permute.xlu0 %1687
        %v1690 = vadd.f32 %v1658, %v1673
        %v1691 = vadd.f32 %v1659, %v1673
        %v1692 = vadd.f32 %v1660, %v1678
        %v1693 = vadd.f32 %v1661, %v1678
        %v1694 = vadd.f32 %v1662, %v1683
        %v1695 = vadd.f32 %v1663, %v1683
        %v1696 = vadd.f32 %v1664, %v1688
        %v1697 = vadd.f32 %v1665, %v1688
        %v1698 = vld [vmem:[%s8] sm:$0xff]
        %v1699 = vld [vmem:[%s8 + $0x8] sm:$0xff]
        %v1700 = vld [vmem:[%s8 + $0x10] sm:$0xff]
        %v1701 = vld [vmem:[%s8 + $0x18] sm:$0xff]
        %1703 = vset.pattern.permute.xlu0 0
        %1704 = vperm.xlu0 %1703, %v1698
        %v1705 = vpop.permute.xlu0 %1704
        %1708 = vset.pattern.permute.xlu0 0
        %1709 = vperm.xlu0 %1708, %v1699
        %v1710 = vpop.permute.xlu0 %1709
        %1713 = vset.pattern.permute.xlu0 0
        %1714 = vperm.xlu0 %1713, %v1700
        %v1715 = vpop.permute.xlu0 %1714
        %1718 = vset.pattern.permute.xlu0 0
        %1719 = vperm.xlu0 %1718, %v1701
        %v1720 = vpop.permute.xlu0 %1719
        %v1722 = vmul.f32 %v1690, %v1705
        %v1723 = vmul.f32 %v1691, %v1705
        %v1724 = vmul.f32 %v1692, %v1710
        %v1725 = vmul.f32 %v1693, %v1710
        %v1726 = vmul.f32 %v1694, %v1715
        %v1727 = vmul.f32 %v1695, %v1715
        %v1728 = vmul.f32 %v1696, %v1720
        %v1729 = vmul.f32 %v1697, %v1720
        %v1730 = vld [vmem:[%s9] sm:$0xff]
        %v1731 = vld [vmem:[%s9 + $0x8] sm:$0xff]
        %v1732 = vld [vmem:[%s9 + $0x10] sm:$0xff]
        %v1733 = vld [vmem:[%s9 + $0x18] sm:$0xff]
        %1735 = vset.pattern.permute.xlu0 0
        %1736 = vperm.xlu0 %1735, %v1730
        %v1737 = vpop.permute.xlu0 %1736
        %1740 = vset.pattern.permute.xlu0 0
        %1741 = vperm.xlu0 %1740, %v1731
        %v1742 = vpop.permute.xlu0 %1741
        %1745 = vset.pattern.permute.xlu0 0
        %1746 = vperm.xlu0 %1745, %v1732
        %v1747 = vpop.permute.xlu0 %1746
        %1750 = vset.pattern.permute.xlu0 0
        %1751 = vperm.xlu0 %1750, %v1733
        %v1752 = vpop.permute.xlu0 %1751
        %v1754 = vadd.f32 %v1722, %v1737
        %v1755 = vadd.f32 %v1723, %v1737
        %v1756 = vadd.f32 %v1724, %v1742
        %v1757 = vadd.f32 %v1725, %v1742
        %v1758 = vadd.f32 %v1726, %v1747
        %v1759 = vadd.f32 %v1727, %v1747
        %v1760 = vadd.f32 %v1728, %v1752
        %v1761 = vadd.f32 %v1729, %v1752
        %v1762 = vadd.f32 %v1754, %v1755
        %1763 = vadd.xlane.f32.xlu0 %v1762
        %v1764 = vpop.xlane.xlu0 %1763
        %v1765 = vadd.f32 %v1756, %v1757
        %1766 = vadd.xlane.f32.xlu0 %v1765
        %v1767 = vpop.xlane.xlu0 %1766
        %v1768 = vadd.f32 %v1758, %v1759
        %1769 = vadd.xlane.f32.xlu0 %v1768
        %v1770 = vpop.xlane.xlu0 %1769
        %v1771 = vadd.f32 %v1760, %v1761
        %1772 = vadd.xlane.f32.xlu0 %v1771
        %v1773 = vpop.xlane.xlu0 %1772
        %v1774 = vrcp.pop 256.0
        %v1775 = vmul.f32 %v1764, %v1774
        %v1776 = vmul.f32 %v1767, %v1774
        %v1777 = vmul.f32 %v1770, %v1774
        %v1778 = vmul.f32 %v1773, %v1774
        %v1779 = vld [vmem:[%s10] sm:$0xff]
        %v1780 = vld [vmem:[%s10 + $0x8] sm:$0xff]
        %v1781 = vld [vmem:[%s10 + $0x10] sm:$0xff]
        %v1782 = vld [vmem:[%s10 + $0x18] sm:$0xff]
        %v1783 = vmul.f32 %v1779, %v1775
        %v1784 = vmul.f32 %v1780, %v1776
        %v1785 = vmul.f32 %v1781, %v1777
        %v1786 = vmul.f32 %v1782, %v1778
        %vm1787 = vcmask 64512
        %v1788 = vsel %vm1787, %v1783, 0.0
        %v1789 = vsel %vm1787, %v1784, 0.0
        %v1790 = vadd.f32 %v1788, %v1789
        %v1791 = vsel %vm1787, %v1785, 0.0
        %v1792 = vadd.f32 %v1790, %v1791
        %v1793 = vsel %vm1787, %v1786, 0.0
        %v1794 = vadd.f32 %v1792, %v1793
        %v1795 = vrot.slane %v1794, 4
        %v1796 = vadd.f32 %v1794, %v1795
        %v1797 = vrot.slane %v1796, 2
        %v1798 = vadd.f32 %v1796, %v1797
        %v1799 = vrot.slane %v1798, 1
        %v1800 = vadd.f32 %v1798, %v1799
        %v1801 = vld [vmem:[%s11] sm:$0x1]
        %v1802 = vadd.f32 %v1800, %v1801
        %v1803 = vmax.f32 %v1802, 0.0
        %v1804 = vld [vmem:[%s12] sm:$0xff]
        %v1805 = vld [vmem:[%s12 + $0x8] sm:$0xff]
        %v1806 = vld [vmem:[%s12 + $0x10] sm:$0xff]
        %v1807 = vld [vmem:[%s12 + $0x18] sm:$0xff]
        %v1808 = vlaneseq
        %v1809 = vshrl.u32 %v1808, 7
        %v1810 = vsub.s32 0, %v1809
        %v1811 = vrot.slane %v1803, %v1810
        %v1812 = vmul.f32 %v1804, %v1811
        %v1813 = vmul.f32 %v1805, %v1811
        %v1814 = vmul.f32 %v1806, %v1811
        %v1815 = vmul.f32 %v1807, %v1811
        %v1816 = vsel %vm1787, %v1812, 0.0
        %1817 = vadd.xlane.f32.xlu0 %v1816
        %v1818 = vpop.xlane.xlu0 %1817
        %v1819 = vsel %vm1787, %v1813, 0.0
        %1820 = vadd.xlane.f32.xlu0 %v1819
        %v1821 = vpop.xlane.xlu0 %1820
        %v1822 = vsel %vm1787, %v1814, 0.0
        %1823 = vadd.xlane.f32.xlu0 %v1822
        %v1824 = vpop.xlane.xlu0 %1823
        %v1825 = vsel %vm1787, %v1815, 0.0
        %1826 = vadd.xlane.f32.xlu0 %v1825
        %v1827 = vpop.xlane.xlu0 %1826
        %v1828 = vld [vmem:[%s13] sm:$0xff]
        %v1829 = vld [vmem:[%s13 + $0x8] sm:$0xff]
        %v1830 = vld [vmem:[%s13 + $0x10] sm:$0xff]
        %v1831 = vld [vmem:[%s13 + $0x18] sm:$0xff]
        %v1832 = vadd.f32 %v1818, %v1828
        %v1833 = vadd.f32 %v1821, %v1829
        %v1834 = vadd.f32 %v1824, %v1830
        %v1835 = vadd.f32 %v1827, %v1831
        %v1836 = vxor.u32 %v1832, 2147483648
        %v1837 = vxor.u32 %v1833, 2147483648
        %v1838 = vxor.u32 %v1834, 2147483648
        %v1839 = vxor.u32 %v1835, 2147483648
        %v1840 = vmul.f32 %v1836, 1.442695
        %v1841 = vpow.pop %v1840
        %v1842 = vmul.f32 %v1837, 1.442695
        %v1843 = vpow.pop %v1842
        %v1844 = vmul.f32 %v1838, 1.442695
        %v1845 = vpow.pop %v1844
        %v1846 = vmul.f32 %v1839, 1.442695
        %v1847 = vpow.pop %v1846
        %v1848 = vadd.f32 %v1841, 1.0
        %v1849 = vadd.f32 %v1843, 1.0
        %v1850 = vadd.f32 %v1845, 1.0
        %v1851 = vadd.f32 %v1847, 1.0
        %v1852 = vrcp.pop %v1848
        %v1853 = vmul.f32 1.0, %v1852
        %v1854 = vrcp.pop %v1849
        %v1855 = vmul.f32 1.0, %v1854
        %v1856 = vrcp.pop %v1850
        %v1857 = vmul.f32 1.0, %v1856
        %v1858 = vrcp.pop %v1851
        %v1859 = vmul.f32 1.0, %v1858
        %1861 = vset.pattern.permute.xlu0 0
        %1862 = vperm.xlu0 %1861, %v1853
        %v1863 = vpop.permute.xlu0 %1862
        %1866 = vset.pattern.permute.xlu0 0
        %1867 = vperm.xlu0 %1866, %v1855
        %v1868 = vpop.permute.xlu0 %1867
        %1871 = vset.pattern.permute.xlu0 0
        %1872 = vperm.xlu0 %1871, %v1857
        %v1873 = vpop.permute.xlu0 %1872
        %1876 = vset.pattern.permute.xlu0 0
        %1877 = vperm.xlu0 %1876, %v1859
        %v1878 = vpop.permute.xlu0 %1877
        %v1880 = vmul.f32 %v1754, %v1863
        %v1881 = vmul.f32 %v1755, %v1863
        %v1882 = vmul.f32 %v1756, %v1868
        %v1883 = vmul.f32 %v1757, %v1868
        %v1884 = vmul.f32 %v1758, %v1873
        %v1885 = vmul.f32 %v1759, %v1873
        %v1886 = vmul.f32 %v1760, %v1878
        %v1887 = vmul.f32 %v1761, %v1878
        %v1888 = vadd.f32 %v1880, %v477
        %v1889 = vadd.f32 %v1881, %v478
        %v1890 = vadd.f32 %v1882, %v479
        %v1891 = vadd.f32 %v1883, %v480
        %v1892 = vadd.f32 %v1884, %v481
        %v1893 = vadd.f32 %v1885, %v482
        %v1894 = vadd.f32 %v1886, %v483
        %v1895 = vadd.f32 %v1887, %v484
        %1896 = vst [vmem:[%s460] sm:$0xff] %v1888
        %1897 = vst [vmem:[%s460 + $0x8] sm:$0xff] %v1889
        %1898 = vst [vmem:[%s460 + $0x10] sm:$0xff] %v1890
        %1899 = vst [vmem:[%s460 + $0x18] sm:$0xff] %v1891
        %1900 = vst [vmem:[%s460 + $0x20] sm:$0xff] %v1892
        %1901 = vst [vmem:[%s460 + $0x28] sm:$0xff] %v1893
        %1902 = vst [vmem:[%s460 + $0x30] sm:$0xff] %v1894
        %1903 = vst [vmem:[%s460 + $0x38] sm:$0xff] %v1895
        %s1904 = sand.u32 %s335, 1
        %s1905 = scalar_lea.sflag [#allocation3], %s1904
        %s1906 = sand.u32 %s335, 1
        %s1907 = smul.addr %s1906, 64
        %s1908 = scalar_lea.vmem [#allocation2], %s1907
        // Predicated region
        $region77: #{tpu_custom_call.1} parent=75 // pred_check
          %p1909 = pneg %p345
        $region78: #{tpu_custom_call.1} parent=75 // pred_check_branch
          %1911 = sbr.rel (%p1909) target = $region80
        $region79: #{tpu_custom_call.1} parent=75 // pred_region
          %s1913 = ssub.s32 1024, 1024
          %1914 = vsyncadd %s1905, %s1913
          %s1915 = smul.addr %s28, 8
          %s1916 = smul.addr %s1915, 128
          %s1917 = scalar_lea.hbm %s14, %s1916
          %s1918 = sshll.u32 %s1908, 4
          %s1919 = int_to_ptr.vmem [resolvable:$true] %s1918
          %1924 = dma.vmem_to_hbm [thread:$0]  %s1919, 1024, %s1917, %s1905, 256, 256, 16
        $region80: #{tpu_custom_call.1} parent=75 // pred_fallthru
          _
      $region76: #{tpu_custom_call.1} parent=5 // pred_fallthru
        _
      %p1925 = scmp.le.s32.totalorder 2, %s23
      // Predicated region
      $region81: #{tpu_custom_call.1} parent=5 // pred_check
        %p1926 = pneg %p1925
      $region82: #{tpu_custom_call.1} parent=5 // pred_check_branch
        %1928 = sbr.rel (%p1926) target = $region84
      $region83: #{tpu_custom_call.1} parent=5 // pred_region
        %s1929 = ssub.s32 %s23, 2
        // Predicated region
        $region85: #{tpu_custom_call.1} parent=83 // pred_check
          %p1930 = pneg %p351
        $region86: #{tpu_custom_call.1} parent=83 // pred_check_branch
          %1932 = sbr.rel (%p1930) target = $region88
        $region87: #{tpu_custom_call.1} parent=83 // pred_region
          %s1933 = sand.u32 %s336, 1
          %s1934 = scalar_lea.sflag [#allocation3], %s1933
          %s1935 = sand.u32 %s336, 1
          %s1936 = smul.addr %s1935, 64
          %s1937 = scalar_lea.vmem [#allocation2], %s1936
          %1938 = dma.done %s1934, 1024
        $region88: #{tpu_custom_call.1} parent=83 // pred_fallthru
          _
      $region84: #{tpu_custom_call.1} parent=5 // pred_fallthru
        _
    $region6: #{tpu_custom_call.1} parent=1 // loop_footer
      %s27 = sadd.s32 1, %s23
    $region7: #{tpu_custom_call.1} parent=1 // loop_footer_branch
      %22 = sbr.rel target = $region3
    $region8: #{tpu_custom_call.1} parent=1 // loop_exit
      _
    %1939 = vsyncpa [#allocation3], 1
    %s1940 = scalar_lea.sflag [#allocation3], 1
    %1941 = vsyncpa %s1940, 1

</llo_original>
